<compile_context>
chip_gen: v7x
topology: tpu7x:2x2x1
jax: 0.10.0
libtpu: 0.0.40
codegen_flags: <defaults>
</compile_context>

<pallas_src>
import functools

import jax
import jax.numpy as jnp
import numpy as np
from jax.experimental import pallas as pl
from jax.experimental.pallas import tpu as pltpu


def _make_kernel(H, W, Cin, Cout, NB, Chid, K, PAD):
    HW = H * W

    def kernel(x_ref, wall_ref, ball_ref, wc1bd_ref, bc1t_ref, mask_ref,
               wc2_ref, bc2_ref, ecoef_ref, ssum_ref, out_ref):
        # ---- im2col patch: one lane-concat of the K*K shifted taps ----------
        taps = []
        for ky in range(K):
            for kx in range(K):
                taps.append(x_ref[0, ky:ky + H, kx:kx + W, :].reshape(HW, Cin))
        patch = jnp.concatenate(taps, axis=-1)           # (HW, K*K*Cin) f32
        patch_bf = patch.astype(jnp.bfloat16)            # bf16 MXU operand

        # ---- fused shared + base convs: ONE matmul, contraction K*K*Cin -----
        # columns: [base_0 | base_1 | ... | base_{NB-1} | shared], Cout each.
        fused = jnp.dot(patch_bf, wall_ref[...],
                        preferred_element_type=jnp.float32) + ball_ref[...]

        # ---- coef branch -----------------------------------------------------
        # 1x1 conv applied to every tap of the patch at once (block-diagonal
        # weight), then taps that land in the zero-padding halo are masked out
        # (ReLU(bias) != 0 there).  The result IS the zero-padded hidden patch
        # matrix of the second coef conv -> one more matmul, contraction
        # K*K*Chid, instead of 9 depth-2 matmuls over a padded scratch buffer.
        hp = jnp.dot(patch_bf, wc1bd_ref[...],
                     preferred_element_type=jnp.float32) + bc1t_ref[...]
        hp = mask_ref[...] * jnp.maximum(hp, 0.0)        # (HW, K*K*Chid) f32
        logits = jnp.dot(hp, wc2_ref[...],
                         preferred_element_type=jnp.float32) + bc2_ref[...]

        if NB > 1:   # softmax over bases (lane reduce + EUP exp/reciprocal)
            m = jnp.max(logits, axis=-1, keepdims=True)
            e = jnp.exp(logits - m)
            denom = jnp.sum(e, axis=-1, keepdims=True)
            coef = e * pl.reciprocal(denom, approx=True)
        else:        # sigmoid
            coef = 1.0 / (1.0 + jnp.exp(-logits))

        # ---- weighted sum over bases + shared residual, all 2D --------------
        # coef_full[p, i*Cout+c] = coef[p, i] for bases, = 1 for the shared
        # block; then one multiply + a constant group-sum matmul produce the
        # output.  No unaligned per-base lane slices, no repeated broadcasts.
        coef_aug = jnp.concatenate(
            [coef, jnp.ones((HW, 1), jnp.float32)], axis=-1)        # (HW, NB+1)
        coef_full = jnp.dot(coef_aug, ecoef_ref[...],
                            preferred_element_type=jnp.float32)     # (HW, OT)
        out = jnp.dot(fused * coef_full, ssum_ref[...],
                      preferred_element_type=jnp.float32)           # (HW, Cout)
        out_ref[0, :, :] = out

    return kernel


def dynamic_conv2d_pallas(x_nchw, params, *, num_bases, kernel_size, padding):
    B, Cin, H, W = x_nchw.shape
    Cout = params["w_shared"].shape[0]
    NB = num_bases
    assert Cin % 8 == 0, "coef branch assumes in_channels divisible by 8"
    Chid = Cin // 8
    assert params["w_c1"].shape[0] == Chid
    K = kernel_size
    PAD = padding
    Hp, Wp = H + 2 * PAD, W + 2 * PAD
    HW = H * W
    KK = K * K
    OT = (NB + 1) * Cout          # fused output width: bases then shared

    f32, bf16 = jnp.float32, jnp.bfloat16

    # ---- glue: layouts / padding (wrapper-side, outside the kernel) ---------
    x = jnp.transpose(x_nchw, (0, 2, 3, 1)).astype(f32)               # NHWC
    x_pad = jnp.pad(x, ((0, 0), (PAD, PAD), (PAD, PAD), (0, 0)))

    # Fused conv weight: [bases | shared] stacked along output channels,
    # flattened to (K*K*Cin, OT) with row order (ky, kx, cin).  bf16 operand.
    w_cat = jnp.concatenate([params["w_bases"], params["w_shared"]], axis=0)
    w_all = jnp.transpose(w_cat, (2, 3, 1, 0)).reshape(KK * Cin, OT).astype(bf16)
    b_all = jnp.concatenate([params["b_bases"], params["b_shared"]]
                            ).reshape(1, OT).astype(f32)

    # Coef 1x1 conv as a block-diagonal (K*K*Cin, K*K*Chid) matrix so it can be
    # applied to every tap of the im2col patch in a single matmul.
    wc1 = params["w_c1"][:, :, 0, 0].T.astype(f32)                    # (Cin,Chid)
    wc1_bd = jnp.kron(jnp.eye(KK, dtype=f32), wc1).astype(bf16)       # (144, 18)
    bc1_t = jnp.tile(params["b_c1"].astype(f32), KK).reshape(1, KK * Chid)

    # Second coef conv flattened to (K*K*Chid, NB), row order (ky, kx, ch).
    wc2 = jnp.transpose(params["w_c2"], (2, 3, 1, 0)
                        ).reshape(KK * Chid, NB).astype(f32)
    bc2 = params["b_c2"].reshape(1, NB).astype(f32)

    # Mask: does tap (ky,kx) at output pixel (h,w) land in the zero-pad halo of
    # the coef conv's (zero-padded) hidden input?  Constant, built host-side.
    mask_np = np.zeros((HW, KK * Chid), np.float32)
    for h in range(H):
        for w in range(W):
            for ky in range(K):
                for kx in range(K):
                    if PAD <= h + ky < PAD + H and PAD <= w + kx < PAD + W:
                        t = ky * K + kx
                        mask_np[h * W + w, t * Chid:(t + 1) * Chid] = 1.0
    mask = jnp.asarray(mask_np)

    # Constant selector matrices for the final combine (all-2D weighted sum).
    e_np = np.zeros((NB + 1, OT), np.float32)
    for i in range(NB):
        e_np[i, i * Cout:(i + 1) * Cout] = 1.0
    e_np[NB, NB * Cout:] = 1.0                                        # shared -> 1
    s_np = np.zeros((OT, Cout), np.float32)
    for i in range(NB + 1):
        s_np[i * Cout:(i + 1) * Cout, :] = np.eye(Cout, dtype=np.float32)
    ecoef = jnp.asarray(e_np)
    ssum = jnp.asarray(s_np)

    kernel = _make_kernel(H, W, Cin, Cout, NB, Chid, K, PAD)

    out_flat = pl.pallas_call(
        kernel,
        out_shape=jax.ShapeDtypeStruct((B, HW, Cout), f32),
        grid_spec=pltpu.PrefetchScalarGridSpec(
            num_scalar_prefetch=0,
            grid=(B,),
            in_specs=[
                pl.BlockSpec((1, Hp, Wp, Cin), lambda b: (b, 0, 0, 0)),
                pl.BlockSpec((KK * Cin, OT), lambda b: (0, 0)),
                pl.BlockSpec((1, OT), lambda b: (0, 0)),
                pl.BlockSpec((KK * Cin, KK * Chid), lambda b: (0, 0)),
                pl.BlockSpec((1, KK * Chid), lambda b: (0, 0)),
                pl.BlockSpec((HW, KK * Chid), lambda b: (0, 0)),
                pl.BlockSpec((KK * Chid, NB), lambda b: (0, 0)),
                pl.BlockSpec((1, NB), lambda b: (0, 0)),
                pl.BlockSpec((NB + 1, OT), lambda b: (0, 0)),
                pl.BlockSpec((OT, Cout), lambda b: (0, 0)),
            ],
            out_specs=pl.BlockSpec((1, HW, Cout), lambda b: (b, 0, 0)),
        ),
        compiler_params=pltpu.CompilerParams(
            dimension_semantics=("parallel",),
            vmem_limit_bytes=64 * 1024 * 1024),
    )(x_pad, w_all, b_all, wc1_bd, bc1_t, mask, wc2, bc2, ecoef, ssum)

    out_nhwc = out_flat.reshape(B, H, W, Cout)
    return jnp.transpose(out_nhwc, (0, 3, 1, 2))                      # NCHW


# ---------------- pure-JAX reference (for correctness check) ----------------
def dynamic_conv2d_ref(x, params, *, num_bases, kernel_size, padding):
    B, Cin, H, W = x.shape
    Cout = params["w_shared"].shape[0]
    NB = num_bases
    hp = jax.lax.Precision.HIGHEST

    def conv(inp, w, b, pad):
        out = jax.lax.conv_general_dilated(
            inp, w, (1, 1), [(pad, pad), (pad, pad)],
            dimension_numbers=("NCHW", "OIHW", "NCHW"), precision=hp)
        return out + b[None, :, None, None]

    shared = conv(x, params["w_shared"], params["b_shared"], padding)
    h = jnp.maximum(conv(x, params["w_c1"], params["b_c1"], 0), 0.0)
    coef = conv(h, params["w_c2"], params["b_c2"], padding)              # [B,NB,H,W]
    coef = jax.nn.softmax(coef, axis=1) if NB > 1 else jax.nn.sigmoid(coef)
    bases = conv(x, params["w_bases"], params["b_bases"], padding)       # [B,NB*Cout,H,W]
    bases = bases.reshape(B, NB, Cout, H, W)
    out = jnp.sum(bases * coef[:, :, None, :, :], axis=1) + shared
    return out


if __name__ == "__main__":
    # Small shapes consistent with the module (use_dis=False default path).
    B, Cin, Cout, H, W = 2, 16, 16, 8, 8
    K, PAD, NB = 3, 1, 9
    Chid = Cin // 8

    key = jax.random.PRNGKey(0)
    ks = jax.random.split(key, 9)
    init = lambda k, s: 0.1 * jax.random.normal(k, s, jnp.float32)

    params = {
        "w_shared": init(ks[0], (Cout, Cin, K, K)),
        "b_shared": init(ks[1], (Cout,)),
        "w_bases":  init(ks[2], (NB * Cout, Cin, K, K)),   # num_bases convs stacked on O
        "b_bases":  init(ks[3], (NB * Cout,)),
        "w_c1":     init(ks[4], (Chid, Cin, 1, 1)),
        "b_c1":     init(ks[5], (Chid,)),
        "w_c2":     init(ks[6], (NB, Chid, K, K)),
        "b_c2":     init(ks[7], (NB,)),
    }
    x = jax.random.normal(ks[8], (B, Cin, H, W), jnp.float32)

    run = functools.partial(dynamic_conv2d_pallas,
                            num_bases=NB, kernel_size=K, padding=PAD)
    out = jax.block_until_ready(run(x, params))

    ref = jax.block_until_ready(
        dynamic_conv2d_ref(x, params, num_bases=NB, kernel_size=K, padding=PAD))
    # Tolerance reflects bf16 MXU operands vs the Precision.HIGHEST f32 reference.
    np.testing.assert_allclose(np.asarray(out), np.asarray(ref),
                               rtol=5e-2, atol=5e-2)
    assert out.shape == (B, Cout, H, W)
    print("KERNEL_OK")
</pallas_src>

<mosaic_0001>
module attributes {stable_mosaic.version = 11 : i64} {
  func.func @kernel(%arg0: i32, %arg1: memref<1x10x10x16xf32, #tpu.memory_space<vmem>>, %arg2: memref<144x160xbf16, #tpu.memory_space<vmem>>, %arg3: memref<1x160xf32, #tpu.memory_space<vmem>>, %arg4: memref<144x18xbf16, #tpu.memory_space<vmem>>, %arg5: memref<1x18xf32, #tpu.memory_space<vmem>>, %arg6: memref<64x18xf32, #tpu.memory_space<vmem>>, %arg7: memref<18x9xf32, #tpu.memory_space<vmem>>, %arg8: memref<1x9xf32, #tpu.memory_space<vmem>>, %arg9: memref<10x160xf32, #tpu.memory_space<vmem>>, %arg10: memref<160x16xf32, #tpu.memory_space<vmem>>, %arg11: memref<1x64x16xf32, #tpu.memory_space<vmem>>) attributes {dimension_semantics = [#tpu.dimension_semantics<parallel>], iteration_bounds = array<i64: 2>, scalar_prefetch = 0 : i64, scratch_operands = 0 : i64, tpu.core_type = #tpu.core_type<tc>, window_params = [{transform_indices = @transform_0, window_bounds = array<i64: 1, 10, 10, 16>}, {pipeline_mode = #tpu.pipeline_mode<synchronous>, transform_indices = @transform_1, window_bounds = array<i64: 144, 160>}, {pipeline_mode = #tpu.pipeline_mode<synchronous>, transform_indices = @transform_2, window_bounds = array<i64: 1, 160>}, {pipeline_mode = #tpu.pipeline_mode<synchronous>, transform_indices = @transform_3, window_bounds = array<i64: 144, 18>}, {pipeline_mode = #tpu.pipeline_mode<synchronous>, transform_indices = @transform_4, window_bounds = array<i64: 1, 18>}, {pipeline_mode = #tpu.pipeline_mode<synchronous>, transform_indices = @transform_5, window_bounds = array<i64: 64, 18>}, {pipeline_mode = #tpu.pipeline_mode<synchronous>, transform_indices = @transform_6, window_bounds = array<i64: 18, 9>}, {pipeline_mode = #tpu.pipeline_mode<synchronous>, transform_indices = @transform_7, window_bounds = array<i64: 1, 9>}, {pipeline_mode = #tpu.pipeline_mode<synchronous>, transform_indices = @transform_8, window_bounds = array<i64: 10, 160>}, {pipeline_mode = #tpu.pipeline_mode<synchronous>, transform_indices = @transform_9, window_bounds = array<i64: 160, 16>}, {transform_indices = @transform_10, window_bounds = array<i64: 1, 64, 16>}]} {
    %c0 = arith.constant 0 : index
    %c0_0 = arith.constant 0 : index
    %c0_1 = arith.constant 0 : index
    %c0_2 = arith.constant 0 : index
    %0 = vector.load %arg1[%c0, %c0_0, %c0_1, %c0_2] : memref<1x10x10x16xf32, #tpu.memory_space<vmem>>, vector<1x8x8x16xf32>
    %1 = vector.shape_cast %0 : vector<1x8x8x16xf32> to vector<8x8x16xf32>
    %2 = vector.shape_cast %1 : vector<8x8x16xf32> to vector<64x16xf32>
    %c0_3 = arith.constant 0 : index
    %c0_4 = arith.constant 0 : index
    %c1 = arith.constant 1 : index
    %c0_5 = arith.constant 0 : index
    %3 = vector.load %arg1[%c0_3, %c0_4, %c1, %c0_5] : memref<1x10x10x16xf32, #tpu.memory_space<vmem>>, vector<1x8x8x16xf32>
    %4 = vector.shape_cast %3 : vector<1x8x8x16xf32> to vector<8x8x16xf32>
    %5 = vector.shape_cast %4 : vector<8x8x16xf32> to vector<64x16xf32>
    %c0_6 = arith.constant 0 : index
    %c0_7 = arith.constant 0 : index
    %c2 = arith.constant 2 : index
    %c0_8 = arith.constant 0 : index
    %6 = vector.load %arg1[%c0_6, %c0_7, %c2, %c0_8] : memref<1x10x10x16xf32, #tpu.memory_space<vmem>>, vector<1x8x8x16xf32>
    %7 = vector.shape_cast %6 : vector<1x8x8x16xf32> to vector<8x8x16xf32>
    %8 = vector.shape_cast %7 : vector<8x8x16xf32> to vector<64x16xf32>
    %c0_9 = arith.constant 0 : index
    %c1_10 = arith.constant 1 : index
    %c0_11 = arith.constant 0 : index
    %c0_12 = arith.constant 0 : index
    %9 = vector.load %arg1[%c0_9, %c1_10, %c0_11, %c0_12] : memref<1x10x10x16xf32, #tpu.memory_space<vmem>>, vector<1x8x8x16xf32>
    %10 = vector.shape_cast %9 : vector<1x8x8x16xf32> to vector<8x8x16xf32>
    %11 = vector.shape_cast %10 : vector<8x8x16xf32> to vector<64x16xf32>
    %c0_13 = arith.constant 0 : index
    %c1_14 = arith.constant 1 : index
    %c1_15 = arith.constant 1 : index
    %c0_16 = arith.constant 0 : index
    %12 = vector.load %arg1[%c0_13, %c1_14, %c1_15, %c0_16] : memref<1x10x10x16xf32, #tpu.memory_space<vmem>>, vector<1x8x8x16xf32>
    %13 = vector.shape_cast %12 : vector<1x8x8x16xf32> to vector<8x8x16xf32>
    %14 = vector.shape_cast %13 : vector<8x8x16xf32> to vector<64x16xf32>
    %c0_17 = arith.constant 0 : index
    %c1_18 = arith.constant 1 : index
    %c2_19 = arith.constant 2 : index
    %c0_20 = arith.constant 0 : index
    %15 = vector.load %arg1[%c0_17, %c1_18, %c2_19, %c0_20] : memref<1x10x10x16xf32, #tpu.memory_space<vmem>>, vector<1x8x8x16xf32>
    %16 = vector.shape_cast %15 : vector<1x8x8x16xf32> to vector<8x8x16xf32>
    %17 = vector.shape_cast %16 : vector<8x8x16xf32> to vector<64x16xf32>
    %c0_21 = arith.constant 0 : index
    %c2_22 = arith.constant 2 : index
    %c0_23 = arith.constant 0 : index
    %c0_24 = arith.constant 0 : index
    %18 = vector.load %arg1[%c0_21, %c2_22, %c0_23, %c0_24] : memref<1x10x10x16xf32, #tpu.memory_space<vmem>>, vector<1x8x8x16xf32>
    %19 = vector.shape_cast %18 : vector<1x8x8x16xf32> to vector<8x8x16xf32>
    %20 = vector.shape_cast %19 : vector<8x8x16xf32> to vector<64x16xf32>
    %c0_25 = arith.constant 0 : index
    %c2_26 = arith.constant 2 : index
    %c1_27 = arith.constant 1 : index
    %c0_28 = arith.constant 0 : index
    %21 = vector.load %arg1[%c0_25, %c2_26, %c1_27, %c0_28] : memref<1x10x10x16xf32, #tpu.memory_space<vmem>>, vector<1x8x8x16xf32>
    %22 = vector.shape_cast %21 : vector<1x8x8x16xf32> to vector<8x8x16xf32>
    %23 = vector.shape_cast %22 : vector<8x8x16xf32> to vector<64x16xf32>
    %c0_29 = arith.constant 0 : index
    %c2_30 = arith.constant 2 : index
    %c2_31 = arith.constant 2 : index
    %c0_32 = arith.constant 0 : index
    %24 = vector.load %arg1[%c0_29, %c2_30, %c2_31, %c0_32] : memref<1x10x10x16xf32, #tpu.memory_space<vmem>>, vector<1x8x8x16xf32>
    %25 = vector.shape_cast %24 : vector<1x8x8x16xf32> to vector<8x8x16xf32>
    %26 = vector.shape_cast %25 : vector<8x8x16xf32> to vector<64x16xf32>
    %27 = tpu.concatenate %2, %5, %8, %11, %14, %17, %20, %23, %26 in 1 : vector<64x16xf32>, vector<64x16xf32>, vector<64x16xf32>, vector<64x16xf32>, vector<64x16xf32>, vector<64x16xf32>, vector<64x16xf32>, vector<64x16xf32>, vector<64x16xf32> -> vector<64x144xf32>
    %28 = arith.truncf %27 : vector<64x144xf32> to vector<64x144xbf16>
    %c0_33 = arith.constant 0 : index
    %c0_34 = arith.constant 0 : index
    %29 = vector.load %arg2[%c0_33, %c0_34] : memref<144x160xbf16, #tpu.memory_space<vmem>>, vector<144x160xbf16>
    %cst = arith.constant dense<0.000000e+00> : vector<64x160xf32>
    %30 = tpu.matmul %28, %29, %cst {dimension_numbers = #tpu.dot_dimension_numbers<[1], [0], [0], [1], [0, 0, 1, 1], [], []>} : vector<64x144xbf16>, vector<144x160xbf16>, vector<64x160xf32> -> vector<64x160xf32>
    %c0_35 = arith.constant 0 : index
    %c0_36 = arith.constant 0 : index
    %31 = vector.load %arg3[%c0_35, %c0_36] : memref<1x160xf32, #tpu.memory_space<vmem>>, vector<1x160xf32>
    %32 = vector.broadcast %31 : vector<1x160xf32> to vector<64x160xf32>
    %33 = arith.addf %30, %32 : vector<64x160xf32>
    %c0_37 = arith.constant 0 : index
    %c0_38 = arith.constant 0 : index
    %34 = vector.load %arg4[%c0_37, %c0_38] : memref<144x18xbf16, #tpu.memory_space<vmem>>, vector<144x18xbf16>
    %cst_39 = arith.constant dense<0.000000e+00> : vector<64x18xf32>
    %35 = tpu.matmul %28, %34, %cst_39 {dimension_numbers = #tpu.dot_dimension_numbers<[1], [0], [0], [1], [0, 0, 1, 1], [], []>} : vector<64x144xbf16>, vector<144x18xbf16>, vector<64x18xf32> -> vector<64x18xf32>
    %c0_40 = arith.constant 0 : index
    %c0_41 = arith.constant 0 : index
    %36 = vector.load %arg5[%c0_40, %c0_41] : memref<1x18xf32, #tpu.memory_space<vmem>>, vector<1x18xf32>
    %37 = vector.broadcast %36 : vector<1x18xf32> to vector<64x18xf32>
    %38 = arith.addf %35, %37 : vector<64x18xf32>
    %c0_42 = arith.constant 0 : index
    %c0_43 = arith.constant 0 : index
    %39 = vector.load %arg6[%c0_42, %c0_43] : memref<64x18xf32, #tpu.memory_space<vmem>>, vector<64x18xf32>
    %cst_44 = arith.constant 0.000000e+00 : f32
    %40 = vector.broadcast %cst_44 : f32 to vector<64x18xf32>
    %41 = arith.maximumf %38, %40 : vector<64x18xf32>
    %42 = arith.mulf %39, %41 : vector<64x18xf32>
    %c0_45 = arith.constant 0 : index
    %c0_46 = arith.constant 0 : index
    %43 = vector.load %arg7[%c0_45, %c0_46] : memref<18x9xf32, #tpu.memory_space<vmem>>, vector<18x9xf32>
    %cst_47 = arith.constant dense<0.000000e+00> : vector<64x9xf32>
    %44 = tpu.matmul %42, %43, %cst_47 {dimension_numbers = #tpu.dot_dimension_numbers<[1], [0], [0], [1], [0, 0, 1, 1], [], []>} : vector<64x18xf32>, vector<18x9xf32>, vector<64x9xf32> -> vector<64x9xf32>
    %c0_48 = arith.constant 0 : index
    %c0_49 = arith.constant 0 : index
    %45 = vector.load %arg8[%c0_48, %c0_49] : memref<1x9xf32, #tpu.memory_space<vmem>>, vector<1x9xf32>
    %46 = vector.broadcast %45 : vector<1x9xf32> to vector<64x9xf32>
    %47 = arith.addf %44, %46 : vector<64x9xf32>
    %cst_50 = arith.constant dense<0xFF800000> : vector<64xf32>
    %48 = vector.multi_reduction <maximumf>, %47, %cst_50 [1] : vector<64x9xf32> to vector<64xf32>
    %49 = vector.shape_cast %48 : vector<64xf32> to vector<64x1xf32>
    %50 = vector.broadcast %49 : vector<64x1xf32> to vector<64x9xf32>
    %51 = arith.subf %47, %50 : vector<64x9xf32>
    %52 = math.exp %51 : vector<64x9xf32>
    %cst_51 = arith.constant dense<0.000000e+00> : vector<64xf32>
    %53 = vector.multi_reduction <add>, %52, %cst_51 [1] : vector<64x9xf32> to vector<64xf32>
    %54 = vector.shape_cast %53 : vector<64xf32> to vector<64x1xf32>
    %55 = tpu.reciprocal %54 {approx = true} : vector<64x1xf32> -> vector<64x1xf32>
    %56 = vector.broadcast %55 : vector<64x1xf32> to vector<64x9xf32>
    %57 = arith.mulf %52, %56 : vector<64x9xf32>
    %cst_52 = arith.constant 1.000000e+00 : f32
    %58 = vector.broadcast %cst_52 : f32 to vector<64x1xf32>
    %59 = tpu.concatenate %57, %58 in 1 : vector<64x9xf32>, vector<64x1xf32> -> vector<64x10xf32>
    %c0_53 = arith.constant 0 : index
    %c0_54 = arith.constant 0 : index
    %60 = vector.load %arg9[%c0_53, %c0_54] : memref<10x160xf32, #tpu.memory_space<vmem>>, vector<10x160xf32>
    %cst_55 = arith.constant dense<0.000000e+00> : vector<64x160xf32>
    %61 = tpu.matmul %59, %60, %cst_55 {dimension_numbers = #tpu.dot_dimension_numbers<[1], [0], [0], [1], [0, 0, 1, 1], [], []>} : vector<64x10xf32>, vector<10x160xf32>, vector<64x160xf32> -> vector<64x160xf32>
    %62 = arith.mulf %33, %61 : vector<64x160xf32>
    %c0_56 = arith.constant 0 : index
    %c0_57 = arith.constant 0 : index
    %63 = vector.load %arg10[%c0_56, %c0_57] : memref<160x16xf32, #tpu.memory_space<vmem>>, vector<160x16xf32>
    %cst_58 = arith.constant dense<0.000000e+00> : vector<64x16xf32>
    %64 = tpu.matmul %62, %63, %cst_58 {dimension_numbers = #tpu.dot_dimension_numbers<[1], [0], [0], [1], [0, 0, 1, 1], [], []>} : vector<64x160xf32>, vector<160x16xf32>, vector<64x16xf32> -> vector<64x16xf32>
    %c0_59 = arith.constant 0 : index
    %c0_60 = arith.constant 0 : index
    %c0_61 = arith.constant 0 : index
    %65 = vector.load %arg11[%c0_59, %c0_60, %c0_61] : memref<1x64x16xf32, #tpu.memory_space<vmem>>, vector<1x64x16xf32>
    %66 = vector.shape_cast %65 : vector<1x64x16xf32> to vector<64x16xf32>
    %67 = vector.shape_cast %64 : vector<64x16xf32> to vector<1x64x16xf32>
    tpu.vector_store %arg11[%c0_59, %c0_60, %c0_61], %67 {strides = array<i32>} : memref<1x64x16xf32, #tpu.memory_space<vmem>>, vector<1x64x16xf32>,
    return
  }
  func.func @transform_0(%arg0: i32) -> (i32, i32, i32, i32) {
    %c0_i32 = arith.constant 0 : i32
    %c0_i32_0 = arith.constant 0 : i32
    %c0_i32_1 = arith.constant 0 : i32
    %c0_i32_2 = arith.constant 0 : i32
    return %arg0, %c0_i32, %c0_i32_0, %c0_i32_1 : i32, i32, i32, i32
  }
  func.func @transform_1(%arg0: i32) -> (i32, i32) {
    %c0_i32 = arith.constant 0 : i32
    %c0_i32_0 = arith.constant 0 : i32
    %c0_i32_1 = arith.constant 0 : i32
    return %c0_i32, %c0_i32_0 : i32, i32
  }
  func.func @transform_2(%arg0: i32) -> (i32, i32) {
    %c0_i32 = arith.constant 0 : i32
    %c0_i32_0 = arith.constant 0 : i32
    %c0_i32_1 = arith.constant 0 : i32
    return %c0_i32, %c0_i32_0 : i32, i32
  }
  func.func @transform_3(%arg0: i32) -> (i32, i32) {
    %c0_i32 = arith.constant 0 : i32
    %c0_i32_0 = arith.constant 0 : i32
    %c0_i32_1 = arith.constant 0 : i32
    return %c0_i32, %c0_i32_0 : i32, i32
  }
  func.func @transform_4(%arg0: i32) -> (i32, i32) {
    %c0_i32 = arith.constant 0 : i32
    %c0_i32_0 = arith.constant 0 : i32
    %c0_i32_1 = arith.constant 0 : i32
    return %c0_i32, %c0_i32_0 : i32, i32
  }
  func.func @transform_5(%arg0: i32) -> (i32, i32) {
    %c0_i32 = arith.constant 0 : i32
    %c0_i32_0 = arith.constant 0 : i32
    %c0_i32_1 = arith.constant 0 : i32
    return %c0_i32, %c0_i32_0 : i32, i32
  }
  func.func @transform_6(%arg0: i32) -> (i32, i32) {
    %c0_i32 = arith.constant 0 : i32
    %c0_i32_0 = arith.constant 0 : i32
    %c0_i32_1 = arith.constant 0 : i32
    return %c0_i32, %c0_i32_0 : i32, i32
  }
  func.func @transform_7(%arg0: i32) -> (i32, i32) {
    %c0_i32 = arith.constant 0 : i32
    %c0_i32_0 = arith.constant 0 : i32
    %c0_i32_1 = arith.constant 0 : i32
    return %c0_i32, %c0_i32_0 : i32, i32
  }
  func.func @transform_8(%arg0: i32) -> (i32, i32) {
    %c0_i32 = arith.constant 0 : i32
    %c0_i32_0 = arith.constant 0 : i32
    %c0_i32_1 = arith.constant 0 : i32
    return %c0_i32, %c0_i32_0 : i32, i32
  }
  func.func @transform_9(%arg0: i32) -> (i32, i32) {
    %c0_i32 = arith.constant 0 : i32
    %c0_i32_0 = arith.constant 0 : i32
    %c0_i32_1 = arith.constant 0 : i32
    return %c0_i32, %c0_i32_0 : i32, i32
  }
  func.func @transform_10(%arg0: i32) -> (i32, i32, i32) {
    %c0_i32 = arith.constant 0 : i32
    %c0_i32_0 = arith.constant 0 : i32
    %c0_i32_1 = arith.constant 0 : i32
    return %arg0, %c0_i32, %c0_i32_0 : i32, i32, i32
  }
}

</mosaic_0001>

<llo_original>
// kernel: tpu_custom_call.1
$region0: #{tpu_custom_call.1}
  #allocation0 [shape = 'u32[]', space=smem, size = 0x4, offset = 0x4, fixed_abs, tag = 'smem constant byte address 0x4 - core index']
  #allocation1 [shape = 'u32[144,128]{1,0:T(1,128)}', space=vmem, size = 0x12000, scoped, tag = 'internal scratch']
  %s0 = inlined_call_operand.hbm [shape: f32[2,10,10,16], index: 0, kind: input, shape index: {}]
  %s1 = inlined_call_operand.hbm [shape: bf16[144,160], index: 1, kind: input, shape index: {}]
  %s2 = inlined_call_operand.hbm [shape: f32[1,160], index: 2, kind: input, shape index: {}]
  %s3 = inlined_call_operand.hbm [shape: bf16[144,18], index: 3, kind: input, shape index: {}]
  %s4 = inlined_call_operand.hbm [shape: f32[1,18], index: 4, kind: input, shape index: {}]
  %s5 = inlined_call_operand.hbm [shape: f32[64,18], index: 5, kind: input, shape index: {}]
  %s6 = inlined_call_operand.hbm [shape: f32[18,9], index: 6, kind: input, shape index: {}]
  %s7 = inlined_call_operand.hbm [shape: f32[1,9], index: 7, kind: input, shape index: {}]
  %s8 = inlined_call_operand.hbm [shape: f32[10,160], index: 8, kind: input, shape index: {}]
  %s9 = inlined_call_operand.hbm [shape: f32[160,16], index: 9, kind: input, shape index: {}]
  %s10 = inlined_call_operand.hbm [shape: f32[2,64,16], index: 10, kind: output, shape index: {}]
  %s11 = sld [smem:[#allocation0]]
  $region113: #{tpu_custom_call.1} parent=0
    _
  %s13 = ssub.s32 1, %s11
  %s14 = scalar_select 0, %s13, %s11
  $region1: #{tpu_custom_call.1} parent=0
    #allocation2 [shape = 'u8[163840]{0}', space=vmem, size = 0x28000, scoped, tag = 'input window, operand 0']
    #allocation3 [shape = 's32[2]{0}', space=sflag, size = 0x8, scoped, tag = 'scoped memory for tpu_custom_call.1']
    #allocation4 [shape = 's32[2]{0}', space=sflag, size = 0x8, scoped, tag = 'scoped memory for tpu_custom_call.1']
    #allocation5 [shape = 'u8[73728]{0}', space=vmem, size = 0x12000, scoped, tag = 'input window, operand 1, single buffered']
    #allocation6 [shape = 's32[1]{0}', space=sflag, size = 0x4, scoped, tag = 'scoped memory for tpu_custom_call.1']
    #allocation7 [shape = 'u8[1024]{0}', space=vmem, size = 0x400, scoped, tag = 'input window, operand 2, single buffered']
    #allocation8 [shape = 'u8[36864]{0}', space=vmem, size = 0x9000, scoped, tag = 'input window, operand 3, single buffered']
    #allocation9 [shape = 's32[1]{0}', space=sflag, size = 0x4, scoped, tag = 'scoped memory for tpu_custom_call.1']
    #allocation10 [shape = 'u8[512]{0}', space=vmem, size = 0x400, scoped, tag = 'input window, operand 4, single buffered']
    #allocation11 [shape = 'u8[32768]{0}', space=vmem, size = 0x8000, scoped, tag = 'input window, operand 5, single buffered']
    #allocation12 [shape = 's32[1]{0}', space=sflag, size = 0x4, scoped, tag = 'scoped memory for tpu_custom_call.1']
    #allocation13 [shape = 'u8[12288]{0}', space=vmem, size = 0x3000, scoped, tag = 'input window, operand 6, single buffered']
    #allocation14 [shape = 'u8[512]{0}', space=vmem, size = 0x400, scoped, tag = 'input window, operand 7, single buffered']
    #allocation15 [shape = 's32[1]{0}', space=sflag, size = 0x4, scoped, tag = 'scoped memory for tpu_custom_call.1']
    #allocation16 [shape = 'u8[16384]{0}', space=vmem, size = 0x4000, scoped, tag = 'input window, operand 8, single buffered']
    #allocation17 [shape = 'u8[81920]{0}', space=vmem, size = 0x14000, scoped, tag = 'input window, operand 9, single buffered']
    #allocation18 [shape = 's32[1]{0}', space=sflag, size = 0x4, scoped, tag = 'scoped memory for tpu_custom_call.1']
    #allocation19 [shape = 'u8[65536]{0}', space=vmem, size = 0x10000, scoped, tag = 'output window, operand 0']
    %15 = vsyncpa [#allocation3], 0
    %s16 = scalar_lea.sflag [#allocation3], 1
    %17 = vsyncpa %s16, 0
    %18 = vsyncpa [#allocation6], 0
    %19 = vsyncpa [#allocation9], 0
    %20 = vsyncpa [#allocation12], 0
    %21 = vsyncpa [#allocation15], 0
    %22 = vsyncpa [#allocation18], 0
    %23 = vsyncpa [#allocation4], 0
    %s24 = scalar_lea.sflag [#allocation4], 1
    %25 = vsyncpa %s24, 0
    loop: start=0, step=1, limit=4
    $region2: #{tpu_custom_call.1} parent=1 // loop_pre_header
      _
    $region3: #{tpu_custom_call.1} parent=1 // loop_header
      %s27 = sphi 0, %s31
      %p28 = scmp.ge.s32.totalorder %s27, 4
      %s37 = sphi 0, %s39
      %s40 = sphi 0, %s37
      %s41 = sphi 0, %s40
      %s57 = sphi 0, %s41
      %s61 = sphi 0, %s61
      %s63 = sphi 0, %s61
      %s64 = sphi 0, %s63
      %s78 = sphi 0, %s64
      %s82 = sphi 0, %s82
      %s84 = sphi 0, %s82
      %s85 = sphi 0, %s84
      %s99 = sphi 0, %s85
      %s103 = sphi 0, %s103
      %s105 = sphi 0, %s103
      %s106 = sphi 0, %s105
      %s120 = sphi 0, %s106
      %s124 = sphi 0, %s124
      %s126 = sphi 0, %s124
      %s127 = sphi 0, %s126
      %s141 = sphi 0, %s127
      %s145 = sphi 0, %s145
      %s147 = sphi 0, %s145
      %s148 = sphi 0, %s147
      %s162 = sphi 0, %s148
      %s166 = sphi 0, %s166
      %s168 = sphi 0, %s166
      %s169 = sphi 0, %s168
      %s183 = sphi 0, %s169
      %s187 = sphi 0, %s187
      %s189 = sphi 0, %s187
      %s190 = sphi 0, %s189
      %s204 = sphi 0, %s190
      %s208 = sphi 0, %s208
      %s210 = sphi 0, %s208
      %s211 = sphi 0, %s210
      %s225 = sphi 0, %s211
      %s229 = sphi 0, %s229
      %s231 = sphi 0, %s229
      %s232 = sphi 0, %s231
      %s246 = sphi 0, %s232
      %s252 = sphi 0, %s254
      %s255 = sphi 0, %s252
      %s256 = sphi 0, %s255
      %s272 = sphi 0, %s256
    $region4: #{tpu_custom_call.1} parent=1 // loop_header_branch
      %30 = sbr.rel (%p28) target = $region8
    $region5: #{tpu_custom_call.1} parent=1 // loop_body
      %s32 = ssub.s32 %s27, 1
      %s33 = ssub.s32 %s27, 2
      %s34 = sadd.s32 %s27, 1
      %s35 = ssub.s32 %s27, %s34
      %p36 = scmp.eq.s32.totalorder %s35, 0
      %s38 = sadd.s32 %s37, 1
      %s39 = scalar_select %p36, %s37, %s38
      %p42 = pneg %p36
      %p43 = scmp.eq.s32.totalorder %s27, 1
      %p44 = por %p42, %p43
      %p45 = scmp.ne.s32.totalorder %s37, %s40
      %p46 = scmp.eq.s32.totalorder %s27, 0
      %p47 = por %p45, %p46
      %p48 = scmp.ne.s32.totalorder %s37, %s40
      %p49 = scmp.eq.s32.totalorder %s32, 1
      %p50 = por %p48, %p49
      %p51 = scmp.ne.s32.totalorder %s40, %s41
      %p52 = scmp.eq.s32.totalorder %s32, 0
      %p53 = por %p51, %p52
      %p54 = scmp.ne.s32.totalorder %s40, %s41
      %p55 = scmp.eq.s32.totalorder %s33, 1
      %p56 = por %p54, %p55
      %p58 = scmp.ne.s32.totalorder %s41, %s57
      %p59 = scmp.eq.s32.totalorder %s33, 0
      %p60 = por %p58, %p59
      %s62 = sadd.s32 %s61, 1
      %p65 = scmp.eq.s32.totalorder %s27, 1
      %p66 = scmp.ne.s32.totalorder %s61, %s63
      %p67 = scmp.eq.s32.totalorder %s27, 0
      %p68 = por %p66, %p67
      %p69 = scmp.ne.s32.totalorder %s61, %s63
      %p70 = scmp.eq.s32.totalorder %s32, 1
      %p71 = por %p69, %p70
      %p72 = scmp.ne.s32.totalorder %s63, %s64
      %p73 = scmp.eq.s32.totalorder %s32, 0
      %p74 = por %p72, %p73
      %p75 = scmp.ne.s32.totalorder %s63, %s64
      %p76 = scmp.eq.s32.totalorder %s33, 1
      %p77 = por %p75, %p76
      %p79 = scmp.ne.s32.totalorder %s64, %s78
      %p80 = scmp.eq.s32.totalorder %s33, 0
      %p81 = por %p79, %p80
      %s83 = sadd.s32 %s82, 1
      %p86 = scmp.eq.s32.totalorder %s27, 1
      %p87 = scmp.ne.s32.totalorder %s82, %s84
      %p88 = scmp.eq.s32.totalorder %s27, 0
      %p89 = por %p87, %p88
      %p90 = scmp.ne.s32.totalorder %s82, %s84
      %p91 = scmp.eq.s32.totalorder %s32, 1
      %p92 = por %p90, %p91
      %p93 = scmp.ne.s32.totalorder %s84, %s85
      %p94 = scmp.eq.s32.totalorder %s32, 0
      %p95 = por %p93, %p94
      %p96 = scmp.ne.s32.totalorder %s84, %s85
      %p97 = scmp.eq.s32.totalorder %s33, 1
      %p98 = por %p96, %p97
      %p100 = scmp.ne.s32.totalorder %s85, %s99
      %p101 = scmp.eq.s32.totalorder %s33, 0
      %p102 = por %p100, %p101
      %s104 = sadd.s32 %s103, 1
      %p107 = scmp.eq.s32.totalorder %s27, 1
      %p108 = scmp.ne.s32.totalorder %s103, %s105
      %p109 = scmp.eq.s32.totalorder %s27, 0
      %p110 = por %p108, %p109
      %p111 = scmp.ne.s32.totalorder %s103, %s105
      %p112 = scmp.eq.s32.totalorder %s32, 1
      %p113 = por %p111, %p112
      %p114 = scmp.ne.s32.totalorder %s105, %s106
      %p115 = scmp.eq.s32.totalorder %s32, 0
      %p116 = por %p114, %p115
      %p117 = scmp.ne.s32.totalorder %s105, %s106
      %p118 = scmp.eq.s32.totalorder %s33, 1
      %p119 = por %p117, %p118
      %p121 = scmp.ne.s32.totalorder %s106, %s120
      %p122 = scmp.eq.s32.totalorder %s33, 0
      %p123 = por %p121, %p122
      %s125 = sadd.s32 %s124, 1
      %p128 = scmp.eq.s32.totalorder %s27, 1
      %p129 = scmp.ne.s32.totalorder %s124, %s126
      %p130 = scmp.eq.s32.totalorder %s27, 0
      %p131 = por %p129, %p130
      %p132 = scmp.ne.s32.totalorder %s124, %s126
      %p133 = scmp.eq.s32.totalorder %s32, 1
      %p134 = por %p132, %p133
      %p135 = scmp.ne.s32.totalorder %s126, %s127
      %p136 = scmp.eq.s32.totalorder %s32, 0
      %p137 = por %p135, %p136
      %p138 = scmp.ne.s32.totalorder %s126, %s127
      %p139 = scmp.eq.s32.totalorder %s33, 1
      %p140 = por %p138, %p139
      %p142 = scmp.ne.s32.totalorder %s127, %s141
      %p143 = scmp.eq.s32.totalorder %s33, 0
      %p144 = por %p142, %p143
      %s146 = sadd.s32 %s145, 1
      %p149 = scmp.eq.s32.totalorder %s27, 1
      %p150 = scmp.ne.s32.totalorder %s145, %s147
      %p151 = scmp.eq.s32.totalorder %s27, 0
      %p152 = por %p150, %p151
      %p153 = scmp.ne.s32.totalorder %s145, %s147
      %p154 = scmp.eq.s32.totalorder %s32, 1
      %p155 = por %p153, %p154
      %p156 = scmp.ne.s32.totalorder %s147, %s148
      %p157 = scmp.eq.s32.totalorder %s32, 0
      %p158 = por %p156, %p157
      %p159 = scmp.ne.s32.totalorder %s147, %s148
      %p160 = scmp.eq.s32.totalorder %s33, 1
      %p161 = por %p159, %p160
      %p163 = scmp.ne.s32.totalorder %s148, %s162
      %p164 = scmp.eq.s32.totalorder %s33, 0
      %p165 = por %p163, %p164
      %s167 = sadd.s32 %s166, 1
      %p170 = scmp.eq.s32.totalorder %s27, 1
      %p171 = scmp.ne.s32.totalorder %s166, %s168
      %p172 = scmp.eq.s32.totalorder %s27, 0
      %p173 = por %p171, %p172
      %p174 = scmp.ne.s32.totalorder %s166, %s168
      %p175 = scmp.eq.s32.totalorder %s32, 1
      %p176 = por %p174, %p175
      %p177 = scmp.ne.s32.totalorder %s168, %s169
      %p178 = scmp.eq.s32.totalorder %s32, 0
      %p179 = por %p177, %p178
      %p180 = scmp.ne.s32.totalorder %s168, %s169
      %p181 = scmp.eq.s32.totalorder %s33, 1
      %p182 = por %p180, %p181
      %p184 = scmp.ne.s32.totalorder %s169, %s183
      %p185 = scmp.eq.s32.totalorder %s33, 0
      %p186 = por %p184, %p185
      %s188 = sadd.s32 %s187, 1
      %p191 = scmp.eq.s32.totalorder %s27, 1
      %p192 = scmp.ne.s32.totalorder %s187, %s189
      %p193 = scmp.eq.s32.totalorder %s27, 0
      %p194 = por %p192, %p193
      %p195 = scmp.ne.s32.totalorder %s187, %s189
      %p196 = scmp.eq.s32.totalorder %s32, 1
      %p197 = por %p195, %p196
      %p198 = scmp.ne.s32.totalorder %s189, %s190
      %p199 = scmp.eq.s32.totalorder %s32, 0
      %p200 = por %p198, %p199
      %p201 = scmp.ne.s32.totalorder %s189, %s190
      %p202 = scmp.eq.s32.totalorder %s33, 1
      %p203 = por %p201, %p202
      %p205 = scmp.ne.s32.totalorder %s190, %s204
      %p206 = scmp.eq.s32.totalorder %s33, 0
      %p207 = por %p205, %p206
      %s209 = sadd.s32 %s208, 1
      %p212 = scmp.eq.s32.totalorder %s27, 1
      %p213 = scmp.ne.s32.totalorder %s208, %s210
      %p214 = scmp.eq.s32.totalorder %s27, 0
      %p215 = por %p213, %p214
      %p216 = scmp.ne.s32.totalorder %s208, %s210
      %p217 = scmp.eq.s32.totalorder %s32, 1
      %p218 = por %p216, %p217
      %p219 = scmp.ne.s32.totalorder %s210, %s211
      %p220 = scmp.eq.s32.totalorder %s32, 0
      %p221 = por %p219, %p220
      %p222 = scmp.ne.s32.totalorder %s210, %s211
      %p223 = scmp.eq.s32.totalorder %s33, 1
      %p224 = por %p222, %p223
      %p226 = scmp.ne.s32.totalorder %s211, %s225
      %p227 = scmp.eq.s32.totalorder %s33, 0
      %p228 = por %p226, %p227
      %s230 = sadd.s32 %s229, 1
      %p233 = scmp.eq.s32.totalorder %s27, 1
      %p234 = scmp.ne.s32.totalorder %s229, %s231
      %p235 = scmp.eq.s32.totalorder %s27, 0
      %p236 = por %p234, %p235
      %p237 = scmp.ne.s32.totalorder %s229, %s231
      %p238 = scmp.eq.s32.totalorder %s32, 1
      %p239 = por %p237, %p238
      %p240 = scmp.ne.s32.totalorder %s231, %s232
      %p241 = scmp.eq.s32.totalorder %s32, 0
      %p242 = por %p240, %p241
      %p243 = scmp.ne.s32.totalorder %s231, %s232
      %p244 = scmp.eq.s32.totalorder %s33, 1
      %p245 = por %p243, %p244
      %p247 = scmp.ne.s32.totalorder %s232, %s246
      %p248 = scmp.eq.s32.totalorder %s33, 0
      %p249 = por %p247, %p248
      %s250 = ssub.s32 %s27, %s34
      %p251 = scmp.eq.s32.totalorder %s250, 0
      %s253 = sadd.s32 %s252, 1
      %s254 = scalar_select %p251, %s252, %s253
      %p257 = pneg %p251
      %p258 = scmp.eq.s32.totalorder %s27, 1
      %p259 = por %p257, %p258
      %p260 = scmp.ne.s32.totalorder %s252, %s255
      %p261 = scmp.eq.s32.totalorder %s27, 0
      %p262 = por %p260, %p261
      %p263 = scmp.ne.s32.totalorder %s252, %s255
      %p264 = scmp.eq.s32.totalorder %s32, 1
      %p265 = por %p263, %p264
      %p266 = scmp.ne.s32.totalorder %s255, %s256
      %p267 = scmp.eq.s32.totalorder %s32, 0
      %p268 = por %p266, %p267
      %p269 = scmp.ne.s32.totalorder %s255, %s256
      %p270 = scmp.eq.s32.totalorder %s33, 1
      %p271 = por %p269, %p270
      %p273 = scmp.ne.s32.totalorder %s256, %s272
      %p274 = scmp.eq.s32.totalorder %s33, 0
      %p275 = por %p273, %p274
      %p276 = scmp.le.s32.totalorder 1, %s27
      %p277 = scmp.lt.s32.totalorder %s27, 3
      %p278 = pnand %p276, %p277
      %p279 = pneg %p278
      // Predicated region
      $region9: #{tpu_custom_call.1} parent=5 // pred_check
        _
      $region10: #{tpu_custom_call.1} parent=5 // pred_check_branch
        %281 = sbr.rel (%p278) target = $region12
      $region11: #{tpu_custom_call.1} parent=5 // pred_region
        %s282 = ssub.s32 %s27, 1
        // Predicated region
        $region13: #{tpu_custom_call.1} parent=11 // pred_check
          %p283 = pneg %p74
        $region14: #{tpu_custom_call.1} parent=11 // pred_check_branch
          %285 = sbr.rel (%p283) target = $region16
        $region15: #{tpu_custom_call.1} parent=11 // pred_region
          %s287 = ssub.s32 2304, 2304
          %288 = vsyncadd [#allocation6], %s287
          %s289 = sshll.u32 [#allocation5], 4
          %s290 = int_to_ptr.vmem [resolvable:$true] %s289
          %295 = dma.hbm_to_vmem [thread:$0]  %s1, 2304, %s290, [#allocation6], 128, 128, 8
        $region16: #{tpu_custom_call.1} parent=11 // pred_fallthru
          _
        // Predicated region
        $region17: #{tpu_custom_call.1} parent=11 // pred_check
          %p296 = pneg %p95
        $region18: #{tpu_custom_call.1} parent=11 // pred_check_branch
          %298 = sbr.rel (%p296) target = $region20
        $region19: #{tpu_custom_call.1} parent=11 // pred_region
          %s300 = ssub.s32 32, 32
          %301 = vsyncadd [#allocation6], %s300
          %s303 = sshll.u32 [#allocation7], 4
          %s304 = int_to_ptr.vmem [resolvable:$true] %s303
          %306 = dma.hbm_to_vmem [thread:$0]  %s2, 32, %s304, [#allocation6]
        $region20: #{tpu_custom_call.1} parent=11 // pred_fallthru
          _
        // Predicated region
        $region21: #{tpu_custom_call.1} parent=11 // pred_check
          %p307 = pneg %p116
        $region22: #{tpu_custom_call.1} parent=11 // pred_check_branch
          %309 = sbr.rel (%p307) target = $region24
        $region23: #{tpu_custom_call.1} parent=11 // pred_region
          %s311 = ssub.s32 1152, 1152
          %312 = vsyncadd [#allocation9], %s311
          %s313 = sshll.u32 [#allocation8], 4
          %s314 = int_to_ptr.vmem [resolvable:$true] %s313
          %319 = dma.hbm_to_vmem [thread:$0]  %s3, 1152, %s314, [#allocation9], 64, 64, 4
        $region24: #{tpu_custom_call.1} parent=11 // pred_fallthru
          _
        // Predicated region
        $region25: #{tpu_custom_call.1} parent=11 // pred_check
          %p320 = pneg %p137
        $region26: #{tpu_custom_call.1} parent=11 // pred_check_branch
          %322 = sbr.rel (%p320) target = $region28
        $region27: #{tpu_custom_call.1} parent=11 // pred_region
          %s324 = ssub.s32 16, 16
          %325 = vsyncadd [#allocation9], %s324
          %s327 = sshll.u32 [#allocation10], 4
          %s328 = int_to_ptr.vmem [resolvable:$true] %s327
          %330 = dma.hbm_to_vmem [thread:$0]  %s4, 16, %s328, [#allocation9]
        $region28: #{tpu_custom_call.1} parent=11 // pred_fallthru
          _
        // Predicated region
        $region29: #{tpu_custom_call.1} parent=11 // pred_check
          %p331 = pneg %p158
        $region30: #{tpu_custom_call.1} parent=11 // pred_check_branch
          %333 = sbr.rel (%p331) target = $region32
        $region31: #{tpu_custom_call.1} parent=11 // pred_region
          %s335 = ssub.s32 1024, 1024
          %336 = vsyncadd [#allocation12], %s335
          %s337 = sshll.u32 [#allocation11], 4
          %s338 = int_to_ptr.vmem [resolvable:$true] %s337
          %343 = dma.hbm_to_vmem [thread:$0]  %s5, 1024, %s338, [#allocation12], 128, 128, 8
        $region32: #{tpu_custom_call.1} parent=11 // pred_fallthru
          _
        // Predicated region
        $region33: #{tpu_custom_call.1} parent=11 // pred_check
          %p344 = pneg %p179
        $region34: #{tpu_custom_call.1} parent=11 // pred_check_branch
          %346 = sbr.rel (%p344) target = $region36
        $region35: #{tpu_custom_call.1} parent=11 // pred_region
          %s348 = ssub.s32 384, 384
          %349 = vsyncadd [#allocation12], %s348
          %s350 = sshll.u32 [#allocation13], 4
          %s351 = int_to_ptr.vmem [resolvable:$true] %s350
          %356 = dma.hbm_to_vmem [thread:$0]  %s6, 384, %s351, [#allocation12], 128, 128, 8
        $region36: #{tpu_custom_call.1} parent=11 // pred_fallthru
          _
        // Predicated region
        $region37: #{tpu_custom_call.1} parent=11 // pred_check
          %p357 = pneg %p200
        $region38: #{tpu_custom_call.1} parent=11 // pred_check_branch
          %359 = sbr.rel (%p357) target = $region40
        $region39: #{tpu_custom_call.1} parent=11 // pred_region
          %s361 = ssub.s32 16, 16
          %362 = vsyncadd [#allocation15], %s361
          %s364 = sshll.u32 [#allocation14], 4
          %s365 = int_to_ptr.vmem [resolvable:$true] %s364
          %367 = dma.hbm_to_vmem [thread:$0]  %s7, 16, %s365, [#allocation15]
        $region40: #{tpu_custom_call.1} parent=11 // pred_fallthru
          _
        // Predicated region
        $region41: #{tpu_custom_call.1} parent=11 // pred_check
          %p368 = pneg %p221
        $region42: #{tpu_custom_call.1} parent=11 // pred_check_branch
          %370 = sbr.rel (%p368) target = $region44
        $region43: #{tpu_custom_call.1} parent=11 // pred_region
          %s372 = ssub.s32 512, 512
          %373 = vsyncadd [#allocation15], %s372
          %s374 = sshll.u32 [#allocation16], 4
          %s375 = int_to_ptr.vmem [resolvable:$true] %s374
          %380 = dma.hbm_to_vmem [thread:$0]  %s8, 512, %s375, [#allocation15], 256, 256, 16
        $region44: #{tpu_custom_call.1} parent=11 // pred_fallthru
          _
        // Predicated region
        $region45: #{tpu_custom_call.1} parent=11 // pred_check
          %p381 = pneg %p242
        $region46: #{tpu_custom_call.1} parent=11 // pred_check_branch
          %383 = sbr.rel (%p381) target = $region48
        $region47: #{tpu_custom_call.1} parent=11 // pred_region
          %s385 = ssub.s32 2560, 2560
          %386 = vsyncadd [#allocation18], %s385
          %s387 = sshll.u32 [#allocation17], 4
          %s388 = int_to_ptr.vmem [resolvable:$true] %s387
          %393 = dma.hbm_to_vmem [thread:$0]  %s9, 2560, %s388, [#allocation18], 128, 128, 8
        $region48: #{tpu_custom_call.1} parent=11 // pred_fallthru
          _
      $region12: #{tpu_custom_call.1} parent=5 // pred_fallthru
        _
      %p394 = scmp.lt.s32.totalorder %s27, 2
      // Predicated region
      $region49: #{tpu_custom_call.1} parent=5 // pred_check
        %p395 = pneg %p394
      $region50: #{tpu_custom_call.1} parent=5 // pred_check_branch
        %397 = sbr.rel (%p395) target = $region52
      $region51: #{tpu_custom_call.1} parent=5 // pred_region
        // Predicated region
        $region53: #{tpu_custom_call.1} parent=51 // pred_check
          %p398 = pneg %p47
        $region54: #{tpu_custom_call.1} parent=51 // pred_check_branch
          %400 = sbr.rel (%p398) target = $region56
        $region55: #{tpu_custom_call.1} parent=51 // pred_region
          %s401 = sand.u32 %s37, 1
          %s402 = scalar_lea.sflag [#allocation3], %s401
          %s403 = sand.u32 %s37, 1
          %s404 = smul.addr %s403, 160
          %s405 = scalar_lea.vmem [#allocation2], %s404
          %s407 = ssub.s32 2560, 2560
          %408 = vsyncadd %s402, %s407
          %s409 = smul.addr %s27, 20
          %s410 = smul.addr %s409, 128
          %s411 = scalar_lea.hbm %s0, %s410
          %s412 = sshll.u32 %s405, 4
          %s413 = int_to_ptr.vmem [resolvable:$true] %s412
          %418 = dma.hbm_to_vmem [thread:$0]  %s411, 2560, %s413, %s402, 128, 128, 8
        $region56: #{tpu_custom_call.1} parent=51 // pred_fallthru
          _
      $region52: #{tpu_custom_call.1} parent=5 // pred_fallthru
        _
      %p419 = scmp.le.s32.totalorder 1, %s27
      %p420 = scmp.lt.s32.totalorder %s27, 3
      %p421 = pnand %p419, %p420
      %p422 = pneg %p421
      // Predicated region
      $region57: #{tpu_custom_call.1} parent=5 // pred_check
        _
      $region58: #{tpu_custom_call.1} parent=5 // pred_check_branch
        %424 = sbr.rel (%p421) target = $region60
      $region59: #{tpu_custom_call.1} parent=5 // pred_region
        %s425 = ssub.s32 %s27, 1
        %s426 = sand.u32 %s40, 1
        %s427 = scalar_lea.sflag [#allocation3], %s426
        %s428 = sand.u32 %s40, 1
        %s429 = smul.addr %s428, 160
        %s430 = scalar_lea.vmem [#allocation2], %s429
        // Predicated region
        $region61: #{tpu_custom_call.1} parent=59 // pred_check
          %p431 = pneg %p53
        $region62: #{tpu_custom_call.1} parent=59 // pred_check_branch
          %433 = sbr.rel (%p431) target = $region64
        $region63: #{tpu_custom_call.1} parent=59 // pred_region
          %434 = dma.done %s427, 2560
        $region64: #{tpu_custom_call.1} parent=59 // pred_fallthru
          _
        // Predicated region
        $region65: #{tpu_custom_call.1} parent=59 // pred_check
          %p435 = pneg %p74
        $region66: #{tpu_custom_call.1} parent=59 // pred_check_branch
          %437 = sbr.rel (%p435) target = $region68
        $region67: #{tpu_custom_call.1} parent=59 // pred_region
          %438 = dma.done [#allocation6], 2304
        $region68: #{tpu_custom_call.1} parent=59 // pred_fallthru
          _
        // Predicated region
        $region69: #{tpu_custom_call.1} parent=59 // pred_check
          %p439 = pneg %p95
        $region70: #{tpu_custom_call.1} parent=59 // pred_check_branch
          %441 = sbr.rel (%p439) target = $region72
        $region71: #{tpu_custom_call.1} parent=59 // pred_region
          %442 = dma.done [#allocation6], 32
        $region72: #{tpu_custom_call.1} parent=59 // pred_fallthru
          _
        // Predicated region
        $region73: #{tpu_custom_call.1} parent=59 // pred_check
          %p443 = pneg %p116
        $region74: #{tpu_custom_call.1} parent=59 // pred_check_branch
          %445 = sbr.rel (%p443) target = $region76
        $region75: #{tpu_custom_call.1} parent=59 // pred_region
          %446 = dma.done [#allocation9], 1152
        $region76: #{tpu_custom_call.1} parent=59 // pred_fallthru
          _
        // Predicated region
        $region77: #{tpu_custom_call.1} parent=59 // pred_check
          %p447 = pneg %p137
        $region78: #{tpu_custom_call.1} parent=59 // pred_check_branch
          %449 = sbr.rel (%p447) target = $region80
        $region79: #{tpu_custom_call.1} parent=59 // pred_region
          %450 = dma.done [#allocation9], 16
        $region80: #{tpu_custom_call.1} parent=59 // pred_fallthru
          _
        // Predicated region
        $region81: #{tpu_custom_call.1} parent=59 // pred_check
          %p451 = pneg %p158
        $region82: #{tpu_custom_call.1} parent=59 // pred_check_branch
          %453 = sbr.rel (%p451) target = $region84
        $region83: #{tpu_custom_call.1} parent=59 // pred_region
          %454 = dma.done [#allocation12], 1024
        $region84: #{tpu_custom_call.1} parent=59 // pred_fallthru
          _
        // Predicated region
        $region85: #{tpu_custom_call.1} parent=59 // pred_check
          %p455 = pneg %p179
        $region86: #{tpu_custom_call.1} parent=59 // pred_check_branch
          %457 = sbr.rel (%p455) target = $region88
        $region87: #{tpu_custom_call.1} parent=59 // pred_region
          %458 = dma.done [#allocation12], 384
        $region88: #{tpu_custom_call.1} parent=59 // pred_fallthru
          _
        // Predicated region
        $region89: #{tpu_custom_call.1} parent=59 // pred_check
          %p459 = pneg %p200
        $region90: #{tpu_custom_call.1} parent=59 // pred_check_branch
          %461 = sbr.rel (%p459) target = $region92
        $region91: #{tpu_custom_call.1} parent=59 // pred_region
          %462 = dma.done [#allocation15], 16
        $region92: #{tpu_custom_call.1} parent=59 // pred_fallthru
          _
        // Predicated region
        $region93: #{tpu_custom_call.1} parent=59 // pred_check
          %p463 = pneg %p221
        $region94: #{tpu_custom_call.1} parent=59 // pred_check_branch
          %465 = sbr.rel (%p463) target = $region96
        $region95: #{tpu_custom_call.1} parent=59 // pred_region
          %466 = dma.done [#allocation15], 512
        $region96: #{tpu_custom_call.1} parent=59 // pred_fallthru
          _
        // Predicated region
        $region97: #{tpu_custom_call.1} parent=59 // pred_check
          %p467 = pneg %p242
        $region98: #{tpu_custom_call.1} parent=59 // pred_check_branch
          %469 = sbr.rel (%p467) target = $region100
        $region99: #{tpu_custom_call.1} parent=59 // pred_region
          %470 = dma.done [#allocation18], 2560
        $region100: #{tpu_custom_call.1} parent=59 // pred_fallthru
          _
        %s471 = sand.u32 %s40, 1
        %s472 = scalar_lea.sflag [#allocation3], %s471
        %s473 = sand.u32 %s40, 1
        %s474 = smul.addr %s473, 160
        %s475 = scalar_lea.vmem [#allocation2], %s474
        %p476 = pneg %p53
        %p477 = pneg %p50
        %p478 = pneg %p74
        %p479 = pneg %p71
        %p480 = pneg %p95
        %p481 = pneg %p92
        %p482 = pneg %p116
        %p483 = pneg %p113
        %p484 = pneg %p137
        %p485 = pneg %p134
        %p486 = pneg %p158
        %p487 = pneg %p155
        %p488 = pneg %p179
        %p489 = pneg %p176
        %p490 = pneg %p200
        %p491 = pneg %p197
        %p492 = pneg %p221
        %p493 = pneg %p218
        %p494 = pneg %p242
        %p495 = pneg %p239
        %p496 = pneg %p268
        %p497 = pneg %p265
        %s498 = sand.u32 %s255, 1
        %s499 = scalar_lea.sflag [#allocation4], %s498
        %s500 = sand.u32 %s255, 1
        %s501 = smul.addr %s500, 64
        %s502 = scalar_lea.vmem [#allocation19], %s501
        %v504 = vld [vmem:[%s430] sm:$0xff]
        %v505 = vld [vmem:[%s430 + $0x10] sm:$0xff]
        %v506 = vld [vmem:[%s430 + $0x20] sm:$0xff]
        %v507 = vld [vmem:[%s430 + $0x30] sm:$0xff]
        %v508 = vld [vmem:[%s430 + $0x40] sm:$0xff]
        %v509 = vld [vmem:[%s430 + $0x50] sm:$0xff]
        %v510 = vld [vmem:[%s430 + $0x60] sm:$0xff]
        %v511 = vld [vmem:[%s430 + $0x70] sm:$0xff]
        %v512 = vld [vmem:[%s430 + $0x1] sm:$0xff]
        %v513 = vld [vmem:[%s430 + $0x11] sm:$0xff]
        %v514 = vld [vmem:[%s430 + $0x21] sm:$0xff]
        %v515 = vld [vmem:[%s430 + $0x31] sm:$0xff]
        %v516 = vld [vmem:[%s430 + $0x41] sm:$0xff]
        %v517 = vld [vmem:[%s430 + $0x51] sm:$0xff]
        %v518 = vld [vmem:[%s430 + $0x61] sm:$0xff]
        %v519 = vld [vmem:[%s430 + $0x71] sm:$0xff]
        %v520 = vld [vmem:[%s430 + $0x2] sm:$0xff]
        %v521 = vld [vmem:[%s430 + $0x12] sm:$0xff]
        %v522 = vld [vmem:[%s430 + $0x22] sm:$0xff]
        %v523 = vld [vmem:[%s430 + $0x32] sm:$0xff]
        %v524 = vld [vmem:[%s430 + $0x42] sm:$0xff]
        %v525 = vld [vmem:[%s430 + $0x52] sm:$0xff]
        %v526 = vld [vmem:[%s430 + $0x62] sm:$0xff]
        %v527 = vld [vmem:[%s430 + $0x72] sm:$0xff]
        %s528 = scalar_lea.vmem %s430, 16 [#allocation2]
        %v529 = vld [vmem:[%s528] sm:$0xff]
        %v530 = vld [vmem:[%s528 + $0x10] sm:$0xff]
        %v531 = vld [vmem:[%s528 + $0x20] sm:$0xff]
        %v532 = vld [vmem:[%s528 + $0x30] sm:$0xff]
        %v533 = vld [vmem:[%s528 + $0x40] sm:$0xff]
        %v534 = vld [vmem:[%s528 + $0x50] sm:$0xff]
        %v535 = vld [vmem:[%s528 + $0x60] sm:$0xff]
        %v536 = vld [vmem:[%s528 + $0x70] sm:$0xff]
        %v537 = vld [vmem:[%s528 + $0x1] sm:$0xff]
        %v538 = vld [vmem:[%s528 + $0x11] sm:$0xff]
        %v539 = vld [vmem:[%s528 + $0x21] sm:$0xff]
        %v540 = vld [vmem:[%s528 + $0x31] sm:$0xff]
        %v541 = vld [vmem:[%s528 + $0x41] sm:$0xff]
        %v542 = vld [vmem:[%s528 + $0x51] sm:$0xff]
        %v543 = vld [vmem:[%s528 + $0x61] sm:$0xff]
        %v544 = vld [vmem:[%s528 + $0x71] sm:$0xff]
        %v545 = vld [vmem:[%s528 + $0x2] sm:$0xff]
        %v546 = vld [vmem:[%s528 + $0x12] sm:$0xff]
        %v547 = vld [vmem:[%s528 + $0x22] sm:$0xff]
        %v548 = vld [vmem:[%s528 + $0x32] sm:$0xff]
        %v549 = vld [vmem:[%s528 + $0x42] sm:$0xff]
        %v550 = vld [vmem:[%s528 + $0x52] sm:$0xff]
        %v551 = vld [vmem:[%s528 + $0x62] sm:$0xff]
        %v552 = vld [vmem:[%s528 + $0x72] sm:$0xff]
        %s553 = scalar_lea.vmem %s430, 32 [#allocation2]
        %v554 = vld [vmem:[%s553] sm:$0xff]
        %v555 = vld [vmem:[%s553 + $0x10] sm:$0xff]
        %v556 = vld [vmem:[%s553 + $0x20] sm:$0xff]
        %v557 = vld [vmem:[%s553 + $0x30] sm:$0xff]
        %v558 = vld [vmem:[%s553 + $0x40] sm:$0xff]
        %v559 = vld [vmem:[%s553 + $0x50] sm:$0xff]
        %v560 = vld [vmem:[%s553 + $0x60] sm:$0xff]
        %v561 = vld [vmem:[%s553 + $0x70] sm:$0xff]
        %v562 = vld [vmem:[%s553 + $0x1] sm:$0xff]
        %v563 = vld [vmem:[%s553 + $0x11] sm:$0xff]
        %v564 = vld [vmem:[%s553 + $0x21] sm:$0xff]
        %v565 = vld [vmem:[%s553 + $0x31] sm:$0xff]
        %v566 = vld [vmem:[%s553 + $0x41] sm:$0xff]
        %v567 = vld [vmem:[%s553 + $0x51] sm:$0xff]
        %v568 = vld [vmem:[%s553 + $0x61] sm:$0xff]
        %v569 = vld [vmem:[%s553 + $0x71] sm:$0xff]
        %v570 = vld [vmem:[%s553 + $0x2] sm:$0xff]
        %v571 = vld [vmem:[%s553 + $0x12] sm:$0xff]
        %v572 = vld [vmem:[%s553 + $0x22] sm:$0xff]
        %v573 = vld [vmem:[%s553 + $0x32] sm:$0xff]
        %v574 = vld [vmem:[%s553 + $0x42] sm:$0xff]
        %v575 = vld [vmem:[%s553 + $0x52] sm:$0xff]
        %v576 = vld [vmem:[%s553 + $0x62] sm:$0xff]
        %v577 = vld [vmem:[%s553 + $0x72] sm:$0xff]
        %586 = vrot.lane.b32.xlu0 %v512, 16
        %v587 = vpop.permute.xlu0 %586
        %588 = vrot.lane.b32.xlu0 %v513, 16
        %v589 = vpop.permute.xlu0 %588
        %590 = vrot.lane.b32.xlu0 %v514, 16
        %v591 = vpop.permute.xlu0 %590
        %592 = vrot.lane.b32.xlu0 %v515, 16
        %v593 = vpop.permute.xlu0 %592
        %594 = vrot.lane.b32.xlu0 %v516, 16
        %v595 = vpop.permute.xlu0 %594
        %596 = vrot.lane.b32.xlu0 %v517, 16
        %v597 = vpop.permute.xlu0 %596
        %598 = vrot.lane.b32.xlu0 %v518, 16
        %v599 = vpop.permute.xlu0 %598
        %600 = vrot.lane.b32.xlu0 %v519, 16
        %v601 = vpop.permute.xlu0 %600
        %618 = vrot.lane.b32.xlu0 %v520, 32
        %v619 = vpop.permute.xlu0 %618
        %620 = vrot.lane.b32.xlu0 %v521, 32
        %v621 = vpop.permute.xlu0 %620
        %622 = vrot.lane.b32.xlu0 %v522, 32
        %v623 = vpop.permute.xlu0 %622
        %624 = vrot.lane.b32.xlu0 %v523, 32
        %v625 = vpop.permute.xlu0 %624
        %626 = vrot.lane.b32.xlu0 %v524, 32
        %v627 = vpop.permute.xlu0 %626
        %628 = vrot.lane.b32.xlu0 %v525, 32
        %v629 = vpop.permute.xlu0 %628
        %630 = vrot.lane.b32.xlu0 %v526, 32
        %v631 = vpop.permute.xlu0 %630
        %632 = vrot.lane.b32.xlu0 %v527, 32
        %v633 = vpop.permute.xlu0 %632
        %650 = vrot.lane.b32.xlu0 %v529, 48
        %v651 = vpop.permute.xlu0 %650
        %652 = vrot.lane.b32.xlu0 %v530, 48
        %v653 = vpop.permute.xlu0 %652
        %654 = vrot.lane.b32.xlu0 %v531, 48
        %v655 = vpop.permute.xlu0 %654
        %656 = vrot.lane.b32.xlu0 %v532, 48
        %v657 = vpop.permute.xlu0 %656
        %658 = vrot.lane.b32.xlu0 %v533, 48
        %v659 = vpop.permute.xlu0 %658
        %660 = vrot.lane.b32.xlu0 %v534, 48
        %v661 = vpop.permute.xlu0 %660
        %662 = vrot.lane.b32.xlu0 %v535, 48
        %v663 = vpop.permute.xlu0 %662
        %664 = vrot.lane.b32.xlu0 %v536, 48
        %v665 = vpop.permute.xlu0 %664
        %682 = vrot.lane.b32.xlu0 %v537, 64
        %v683 = vpop.permute.xlu0 %682
        %684 = vrot.lane.b32.xlu0 %v538, 64
        %v685 = vpop.permute.xlu0 %684
        %686 = vrot.lane.b32.xlu0 %v539, 64
        %v687 = vpop.permute.xlu0 %686
        %688 = vrot.lane.b32.xlu0 %v540, 64
        %v689 = vpop.permute.xlu0 %688
        %690 = vrot.lane.b32.xlu0 %v541, 64
        %v691 = vpop.permute.xlu0 %690
        %692 = vrot.lane.b32.xlu0 %v542, 64
        %v693 = vpop.permute.xlu0 %692
        %694 = vrot.lane.b32.xlu0 %v543, 64
        %v695 = vpop.permute.xlu0 %694
        %696 = vrot.lane.b32.xlu0 %v544, 64
        %v697 = vpop.permute.xlu0 %696
        %714 = vrot.lane.b32.xlu0 %v545, 80
        %v715 = vpop.permute.xlu0 %714
        %716 = vrot.lane.b32.xlu0 %v546, 80
        %v717 = vpop.permute.xlu0 %716
        %718 = vrot.lane.b32.xlu0 %v547, 80
        %v719 = vpop.permute.xlu0 %718
        %720 = vrot.lane.b32.xlu0 %v548, 80
        %v721 = vpop.permute.xlu0 %720
        %722 = vrot.lane.b32.xlu0 %v549, 80
        %v723 = vpop.permute.xlu0 %722
        %724 = vrot.lane.b32.xlu0 %v550, 80
        %v725 = vpop.permute.xlu0 %724
        %726 = vrot.lane.b32.xlu0 %v551, 80
        %v727 = vpop.permute.xlu0 %726
        %728 = vrot.lane.b32.xlu0 %v552, 80
        %v729 = vpop.permute.xlu0 %728
        %746 = vrot.lane.b32.xlu0 %v554, 96
        %v747 = vpop.permute.xlu0 %746
        %748 = vrot.lane.b32.xlu0 %v555, 96
        %v749 = vpop.permute.xlu0 %748
        %750 = vrot.lane.b32.xlu0 %v556, 96
        %v751 = vpop.permute.xlu0 %750
        %752 = vrot.lane.b32.xlu0 %v557, 96
        %v753 = vpop.permute.xlu0 %752
        %754 = vrot.lane.b32.xlu0 %v558, 96
        %v755 = vpop.permute.xlu0 %754
        %756 = vrot.lane.b32.xlu0 %v559, 96
        %v757 = vpop.permute.xlu0 %756
        %758 = vrot.lane.b32.xlu0 %v560, 96
        %v759 = vpop.permute.xlu0 %758
        %760 = vrot.lane.b32.xlu0 %v561, 96
        %v761 = vpop.permute.xlu0 %760
        %778 = vrot.lane.b32.xlu0 %v562, 112
        %v779 = vpop.permute.xlu0 %778
        %780 = vrot.lane.b32.xlu0 %v563, 112
        %v781 = vpop.permute.xlu0 %780
        %782 = vrot.lane.b32.xlu0 %v564, 112
        %v783 = vpop.permute.xlu0 %782
        %784 = vrot.lane.b32.xlu0 %v565, 112
        %v785 = vpop.permute.xlu0 %784
        %786 = vrot.lane.b32.xlu0 %v566, 112
        %v787 = vpop.permute.xlu0 %786
        %788 = vrot.lane.b32.xlu0 %v567, 112
        %v789 = vpop.permute.xlu0 %788
        %790 = vrot.lane.b32.xlu0 %v568, 112
        %v791 = vpop.permute.xlu0 %790
        %792 = vrot.lane.b32.xlu0 %v569, 112
        %v793 = vpop.permute.xlu0 %792
        %vm802 = vcmask 130048
        %v803 = vsel %vm802, %v504, %v587
        %v804 = vsel %vm802, %v505, %v589
        %v805 = vsel %vm802, %v506, %v591
        %v806 = vsel %vm802, %v507, %v593
        %v807 = vsel %vm802, %v508, %v595
        %v808 = vsel %vm802, %v509, %v597
        %v809 = vsel %vm802, %v510, %v599
        %v810 = vsel %vm802, %v511, %v601
        %vm811 = vcmask 261120
        %v812 = vsel %vm811, %v803, %v619
        %v813 = vsel %vm811, %v804, %v621
        %v814 = vsel %vm811, %v805, %v623
        %v815 = vsel %vm811, %v806, %v625
        %v816 = vsel %vm811, %v807, %v627
        %v817 = vsel %vm811, %v808, %v629
        %v818 = vsel %vm811, %v809, %v631
        %v819 = vsel %vm811, %v810, %v633
        %vm820 = vcmask 392192
        %v821 = vsel %vm820, %v812, %v651
        %v822 = vsel %vm820, %v813, %v653
        %v823 = vsel %vm820, %v814, %v655
        %v824 = vsel %vm820, %v815, %v657
        %v825 = vsel %vm820, %v816, %v659
        %v826 = vsel %vm820, %v817, %v661
        %v827 = vsel %vm820, %v818, %v663
        %v828 = vsel %vm820, %v819, %v665
        %vm829 = vcmask 523264
        %v830 = vsel %vm829, %v821, %v683
        %v831 = vsel %vm829, %v822, %v685
        %v832 = vsel %vm829, %v823, %v687
        %v833 = vsel %vm829, %v824, %v689
        %v834 = vsel %vm829, %v825, %v691
        %v835 = vsel %vm829, %v826, %v693
        %v836 = vsel %vm829, %v827, %v695
        %v837 = vsel %vm829, %v828, %v697
        %vm838 = vcmask 654336
        %v839 = vsel %vm838, %v830, %v715
        %v840 = vsel %vm838, %v831, %v717
        %v841 = vsel %vm838, %v832, %v719
        %v842 = vsel %vm838, %v833, %v721
        %v843 = vsel %vm838, %v834, %v723
        %v844 = vsel %vm838, %v835, %v725
        %v845 = vsel %vm838, %v836, %v727
        %v846 = vsel %vm838, %v837, %v729
        %vm847 = vcmask 785408
        %v848 = vsel %vm847, %v839, %v747
        %v849 = vsel %vm847, %v840, %v749
        %v850 = vsel %vm847, %v841, %v751
        %v851 = vsel %vm847, %v842, %v753
        %v852 = vsel %vm847, %v843, %v755
        %v853 = vsel %vm847, %v844, %v757
        %v854 = vsel %vm847, %v845, %v759
        %v855 = vsel %vm847, %v846, %v761
        %vm856 = vcmask 916480
        %v857 = vsel %vm856, %v848, %v779
        %v858 = vsel %vm856, %v849, %v781
        %v859 = vsel %vm856, %v850, %v783
        %v860 = vsel %vm856, %v851, %v785
        %v861 = vsel %vm856, %v852, %v787
        %v862 = vsel %vm856, %v853, %v789
        %v863 = vsel %vm856, %v854, %v791
        %v864 = vsel %vm856, %v855, %v793
        %v865 = vpack.c.bf16 %v858, %v857
        %v866 = vpack.c.bf16 %v571, %v570
        %v867 = vpack.c.bf16 %v860, %v859
        %v868 = vpack.c.bf16 %v573, %v572
        %v869 = vpack.c.bf16 %v862, %v861
        %v870 = vpack.c.bf16 %v575, %v574
        %v871 = vpack.c.bf16 %v864, %v863
        %v872 = vpack.c.bf16 %v577, %v576
        %v873 = vld [vmem:[#allocation5] sm:$0xff]
        %v874 = vld [vmem:[#allocation5 + $0x8] sm:$0xff]
        %v875 = vld [vmem:[#allocation5 + $0x10] sm:$0xff]
        %v876 = vld [vmem:[#allocation5 + $0x18] sm:$0xff]
        %v877 = vld [vmem:[#allocation5 + $0x20] sm:$0xff]
        %v878 = vld [vmem:[#allocation5 + $0x28] sm:$0xff]
        %v879 = vld [vmem:[#allocation5 + $0x30] sm:$0xff]
        %v880 = vld [vmem:[#allocation5 + $0x38] sm:$0xff]
        %v881 = vld [vmem:[#allocation5 + $0x40] sm:$0xff]
        %v882 = vld [vmem:[#allocation5 + $0x48] sm:$0xff]
        %v883 = vld [vmem:[#allocation5 + $0x50] sm:$0xff]
        %v884 = vld [vmem:[#allocation5 + $0x58] sm:$0xff]
        %v885 = vld [vmem:[#allocation5 + $0x60] sm:$0xff]
        %v886 = vld [vmem:[#allocation5 + $0x68] sm:$0xff]
        %v887 = vld [vmem:[#allocation5 + $0x70] sm:$0xff]
        %v888 = vld [vmem:[#allocation5 + $0x78] sm:$0xff]
        %v889 = vld [vmem:[#allocation5 + $0x80] sm:$0xff]
        %v890 = vld [vmem:[#allocation5 + $0x88] sm:$0xff]
        %v891 = vld [vmem:[#allocation7] sm:$0x3]
        %v893 = vlaneseq
        %v894 = vshrl.u32 %v893, 7
        %v895 = vsub.s32 0, %v894
        %v896 = vrot.slane %v891, %v895
        %v897 = vlaneseq
        %v898 = vshrl.u32 %v897, 7
        %v899 = vsub.s32 1, %v898
        %v900 = vrot.slane %v891, %v899
        %v921 = vunpack.c.l.b16 %v873
        %v922 = vunpack.c.h.b16 %v873
        %v923 = vunpack.c.l.b16 %v874
        %v924 = vunpack.c.h.b16 %v874
        %v925 = vunpack.c.l.b16 %v875
        %v926 = vunpack.c.h.b16 %v875
        %v927 = vunpack.c.l.b16 %v876
        %v928 = vunpack.c.h.b16 %v876
        %v929 = vunpack.c.l.b16 %v877
        %v930 = vunpack.c.h.b16 %v877
        %v931 = vunpack.c.l.b16 %v878
        %v932 = vunpack.c.h.b16 %v878
        %v933 = vunpack.c.l.b16 %v879
        %v934 = vunpack.c.h.b16 %v879
        %v935 = vunpack.c.l.b16 %v880
        %v936 = vunpack.c.h.b16 %v880
        %v937 = vunpack.c.l.b16 %v881
        %v938 = vunpack.c.h.b16 %v881
        %v939 = vunpack.c.l.b16 %v882
        %v940 = vunpack.c.h.b16 %v882
        %v941 = vunpack.c.l.b16 %v883
        %v942 = vunpack.c.h.b16 %v883
        %v943 = vunpack.c.l.b16 %v884
        %v944 = vunpack.c.h.b16 %v884
        %v945 = vunpack.c.l.b16 %v885
        %v946 = vunpack.c.h.b16 %v885
        %v947 = vunpack.c.l.b16 %v886
        %v948 = vunpack.c.h.b16 %v886
        %v949 = vunpack.c.l.b16 %v887
        %v950 = vunpack.c.h.b16 %v887
        %v951 = vunpack.c.l.b16 %v888
        %v952 = vunpack.c.h.b16 %v888
        %v953 = vunpack.c.l.b16 %v889
        %v954 = vunpack.c.h.b16 %v889
        %v955 = vunpack.c.l.b16 %v890
        %v956 = vunpack.c.h.b16 %v890
        %v957 = vpack.c.b16 %v923, %v921
        %v958 = vpack.c.b16 %v924, %v922
        %v959 = vpack.c.b16 %v927, %v925
        %v960 = vpack.c.b16 %v928, %v926
        %v961 = vpack.c.b16 %v931, %v929
        %v962 = vpack.c.b16 %v932, %v930
        %v963 = vpack.c.b16 %v935, %v933
        %v964 = vpack.c.b16 %v936, %v934
        %v965 = vpack.c.b16 %v939, %v937
        %v966 = vpack.c.b16 %v940, %v938
        %v967 = vpack.c.b16 %v943, %v941
        %v968 = vpack.c.b16 %v944, %v942
        %v969 = vpack.c.b16 %v947, %v945
        %v970 = vpack.c.b16 %v948, %v946
        %v971 = vpack.c.b16 %v951, %v949
        %v972 = vpack.c.b16 %v952, %v950
        %v973 = vpack.c.b16 %v955, %v953
        %v974 = vpack.c.b16 %v956, %v954
        %v994 = vsel %vm802, %v866, 0
        %v997 = vsel %vm802, %v868, 0
        %v1000 = vsel %vm802, %v870, 0
        %v1003 = vsel %vm802, %v872, 0
        %1005 = vmatprep.subr.bf16.mxu0 %v958
        %1006 = vmatpush1.bf16.msra.mxu0 %v957
        %1007 = vmatprep.subr.bf16.mxu0 %v960
        %1008 = vmatpush1.bf16.msra.mxu0 %v959
        %1009 = vmatprep.subr.bf16.mxu0 %v962
        %1010 = vmatpush1.bf16.msra.mxu0 %v961
        %1011 = vmatprep.subr.bf16.mxu0 %v964
        %1012 = vmatpush1.bf16.msra.mxu0 %v963
        %1013 = vmatprep.subr.bf16.mxu0 %v966
        %1014 = vmatpush1.bf16.msra.mxu0 %v965
        %1015 = vmatprep.subr.bf16.mxu0 %v968
        %1016 = vmatpush1.bf16.msra.mxu0 %v967
        %1017 = vmatprep.subr.bf16.mxu0 %v970
        %1018 = vmatpush1.bf16.msra.mxu0 %v969
        %1019 = vmatprep.subr.bf16.mxu0 %v972
        %1020 = vmatpush1.bf16.msra.mxu0 %v971
        %1021 = vmatprep.subr.bf16.mxu0 %v974
        %1022 = vmatpush1.bf16.msra.mxu0 %v973
        %1023 = vmatprep.subr.bf16.mxu0 0
        %1024 = vmatpush1.bf16.msra.mxu0 0
        %1025 = vmatprep.subr.bf16.mxu0 0
        %1026 = vmatpush1.bf16.msra.mxu0 0
        %1027 = vmatprep.subr.bf16.mxu0 0
        %1028 = vmatpush1.bf16.msra.mxu0 0
        %1029 = vmatprep.subr.bf16.mxu0 0
        %1030 = vmatpush1.bf16.msra.mxu0 0
        %1031 = vmatprep.subr.bf16.mxu0 0
        %1032 = vmatpush1.bf16.msra.mxu0 0
        %1033 = vmatprep.subr.bf16.mxu0 0
        %1034 = vmatpush1.bf16.msra.mxu0 0
        %1035 = vmatprep.subr.bf16.mxu0 0
        %1036 = vmatpush1.bf16.msra.mxu0 0
        %1037 = vmatprep.mubr.bf16.mxu0 %v994
        %1038 = vmatmul.mubr.bf16.gmra.mrb[0].mxu0 %v865
        %v1039 = vpop.f32.mrb[0].mxu0
        %v1040 = vadd.f32 %v896, %v1039
        %v1041 = vpop.f32.mrb[0].mxu0
        %v1042 = vadd.f32 %v900, %v1041
        %v1043 = vpop.f32.mrb[0].mxu0
        %v1044 = vadd.f32 %v896, %v1043
        %v1045 = vpop.f32.mrb[0].mxu0
        %v1046 = vadd.f32 %v900, %v1045
        %1047 = vmatprep.mubr.bf16.mxu0 %v997
        %1048 = vmatmul.mubr.bf16.gmra.mrb[0].mxu0 %v867
        %v1049 = vpop.f32.mrb[0].mxu0
        %v1050 = vadd.f32 %v896, %v1049
        %v1051 = vpop.f32.mrb[0].mxu0
        %v1052 = vadd.f32 %v900, %v1051
        %v1053 = vpop.f32.mrb[0].mxu0
        %v1054 = vadd.f32 %v896, %v1053
        %v1055 = vpop.f32.mrb[0].mxu0
        %v1056 = vadd.f32 %v900, %v1055
        %1057 = vmatprep.mubr.bf16.mxu0 %v1000
        %1058 = vmatmul.mubr.bf16.gmra.mrb[0].mxu0 %v869
        %v1059 = vpop.f32.mrb[0].mxu0
        %v1060 = vadd.f32 %v896, %v1059
        %v1061 = vpop.f32.mrb[0].mxu0
        %v1062 = vadd.f32 %v900, %v1061
        %v1063 = vpop.f32.mrb[0].mxu0
        %v1064 = vadd.f32 %v896, %v1063
        %v1065 = vpop.f32.mrb[0].mxu0
        %v1066 = vadd.f32 %v900, %v1065
        %1067 = vmatprep.mubr.bf16.mxu0 %v1003
        %1068 = vmatmul.mubr.bf16.gmra.mrb[0].mxu0 %v871
        %v1069 = vpop.f32.mrb[0].mxu0
        %v1070 = vadd.f32 %v896, %v1069
        %v1071 = vpop.f32.mrb[0].mxu0
        %v1072 = vadd.f32 %v900, %v1071
        %v1073 = vpop.f32.mrb[0].mxu0
        %v1074 = vadd.f32 %v896, %v1073
        %v1075 = vpop.f32.mrb[0].mxu0
        %v1076 = vadd.f32 %v900, %v1075
        %1077 = vdwg.mxu0
        %v1078 = vld [vmem:[#allocation8] sm:$0xf]
        %v1079 = vld [vmem:[#allocation8 + $0x4] sm:$0xf]
        %v1080 = vld [vmem:[#allocation8 + $0x8] sm:$0xf]
        %v1081 = vld [vmem:[#allocation8 + $0xc] sm:$0xf]
        %v1082 = vld [vmem:[#allocation8 + $0x10] sm:$0xf]
        %v1083 = vld [vmem:[#allocation8 + $0x14] sm:$0xf]
        %v1084 = vld [vmem:[#allocation8 + $0x18] sm:$0xf]
        %v1085 = vld [vmem:[#allocation8 + $0x1c] sm:$0xf]
        %v1086 = vld [vmem:[#allocation8 + $0x20] sm:$0xf]
        %v1087 = vld [vmem:[#allocation8 + $0x24] sm:$0xf]
        %v1088 = vld [vmem:[#allocation8 + $0x28] sm:$0xf]
        %v1089 = vld [vmem:[#allocation8 + $0x2c] sm:$0xf]
        %v1090 = vld [vmem:[#allocation8 + $0x30] sm:$0xf]
        %v1091 = vld [vmem:[#allocation8 + $0x34] sm:$0xf]
        %v1092 = vld [vmem:[#allocation8 + $0x38] sm:$0xf]
        %v1093 = vld [vmem:[#allocation8 + $0x3c] sm:$0xf]
        %v1094 = vld [vmem:[#allocation8 + $0x40] sm:$0xf]
        %v1095 = vld [vmem:[#allocation8 + $0x44] sm:$0xf]
        %v1096 = vld [vmem:[#allocation10] sm:$0x1]
        %v1098 = vlaneseq
        %v1099 = vshrl.u32 %v1098, 7
        %v1100 = vsub.s32 0, %v1099
        %v1101 = vrot.slane %v1096, %v1100
        %v1121 = vunpack.c.l.b16 %v1078
        %v1122 = vunpack.c.l.b16 %v1079
        %v1123 = vunpack.c.l.b16 %v1080
        %v1124 = vunpack.c.l.b16 %v1081
        %v1125 = vunpack.c.l.b16 %v1082
        %v1126 = vunpack.c.l.b16 %v1083
        %v1127 = vunpack.c.l.b16 %v1084
        %v1128 = vunpack.c.l.b16 %v1085
        %v1129 = vunpack.c.l.b16 %v1086
        %v1130 = vunpack.c.l.b16 %v1087
        %v1131 = vunpack.c.l.b16 %v1088
        %v1132 = vunpack.c.l.b16 %v1089
        %v1133 = vunpack.c.l.b16 %v1090
        %v1134 = vunpack.c.l.b16 %v1091
        %v1135 = vunpack.c.l.b16 %v1092
        %v1136 = vunpack.c.l.b16 %v1093
        %v1137 = vunpack.c.l.b16 %v1094
        %v1138 = vunpack.c.l.b16 %v1095
        %v1139 = vpack.c.b16 %v1122, %v1121
        %v1140 = vpack.c.b16 %v1124, %v1123
        %v1141 = vpack.c.b16 %v1126, %v1125
        %v1142 = vpack.c.b16 %v1128, %v1127
        %v1143 = vpack.c.b16 %v1130, %v1129
        %v1144 = vpack.c.b16 %v1132, %v1131
        %v1145 = vpack.c.b16 %v1134, %v1133
        %v1146 = vpack.c.b16 %v1136, %v1135
        %v1147 = vpack.c.b16 %v1138, %v1137
        %1157 = vmatprep.subr.bf16.mxu0 0
        %1158 = vmatpush1.bf16.msra.mxu0 %v1139
        %1159 = vmatprep.subr.bf16.mxu0 0
        %1160 = vmatpush1.bf16.msra.mxu0 %v1140
        %1161 = vmatprep.subr.bf16.mxu0 0
        %1162 = vmatpush1.bf16.msra.mxu0 %v1141
        %1163 = vmatprep.subr.bf16.mxu0 0
        %1164 = vmatpush1.bf16.msra.mxu0 %v1142
        %1165 = vmatprep.subr.bf16.mxu0 0
        %1166 = vmatpush1.bf16.msra.mxu0 %v1143
        %1167 = vmatprep.subr.bf16.mxu0 0
        %1168 = vmatpush1.bf16.msra.mxu0 %v1144
        %1169 = vmatprep.subr.bf16.mxu0 0
        %1170 = vmatpush1.bf16.msra.mxu0 %v1145
        %1171 = vmatprep.subr.bf16.mxu0 0
        %1172 = vmatpush1.bf16.msra.mxu0 %v1146
        %1173 = vmatprep.subr.bf16.mxu0 0
        %1174 = vmatpush1.bf16.msra.mxu0 %v1147
        %1175 = vmatprep.subr.bf16.mxu0 0
        %1176 = vmatpush1.bf16.msra.mxu0 0
        %1177 = vmatprep.subr.bf16.mxu0 0
        %1178 = vmatpush1.bf16.msra.mxu0 0
        %1179 = vmatprep.subr.bf16.mxu0 0
        %1180 = vmatpush1.bf16.msra.mxu0 0
        %1181 = vmatprep.subr.bf16.mxu0 0
        %1182 = vmatpush1.bf16.msra.mxu0 0
        %1183 = vmatprep.subr.bf16.mxu0 0
        %1184 = vmatpush1.bf16.msra.mxu0 0
        %1185 = vmatprep.subr.bf16.mxu0 0
        %1186 = vmatpush1.bf16.msra.mxu0 0
        %1187 = vmatprep.subr.bf16.mxu0 0
        %1188 = vmatpush1.bf16.msra.mxu0 0
        %1189 = vmatprep.mubr.bf16.mxu0 %v994
        %1190 = vmatmul.mubr.bf16.gmra.mrb[0].mxu0 %v865
        %v1191 = vpop.f32.mrb[0].mxu0
        %v1192 = vadd.f32 %v1101, %v1191
        %v1193 = vpop.f32.mrb[0].mxu0
        %v1194 = vpop.f32.mrb[0].mxu0
        %v1195 = vadd.f32 %v1101, %v1194
        %v1196 = vpop.f32.mrb[0].mxu0
        %1197 = vmatprep.mubr.bf16.mxu0 %v997
        %1198 = vmatmul.mubr.bf16.gmra.mrb[0].mxu0 %v867
        %v1199 = vpop.f32.mrb[0].mxu0
        %v1200 = vadd.f32 %v1101, %v1199
        %v1201 = vpop.f32.mrb[0].mxu0
        %v1202 = vpop.f32.mrb[0].mxu0
        %v1203 = vadd.f32 %v1101, %v1202
        %v1204 = vpop.f32.mrb[0].mxu0
        %1205 = vmatprep.mubr.bf16.mxu0 %v1000
        %1206 = vmatmul.mubr.bf16.gmra.mrb[0].mxu0 %v869
        %v1207 = vpop.f32.mrb[0].mxu0
        %v1208 = vadd.f32 %v1101, %v1207
        %v1209 = vpop.f32.mrb[0].mxu0
        %v1210 = vpop.f32.mrb[0].mxu0
        %v1211 = vadd.f32 %v1101, %v1210
        %v1212 = vpop.f32.mrb[0].mxu0
        %1213 = vmatprep.mubr.bf16.mxu0 %v1003
        %1214 = vmatmul.mubr.bf16.gmra.mrb[0].mxu0 %v871
        %v1215 = vpop.f32.mrb[0].mxu0
        %v1216 = vadd.f32 %v1101, %v1215
        %v1217 = vpop.f32.mrb[0].mxu0
        %v1218 = vpop.f32.mrb[0].mxu0
        %v1219 = vadd.f32 %v1101, %v1218
        %v1220 = vpop.f32.mrb[0].mxu0
        %1221 = vdwg.mxu0
        %v1222 = vld [vmem:[#allocation11] sm:$0xff]
        %v1223 = vld [vmem:[#allocation11 + $0x8] sm:$0xff]
        %v1224 = vld [vmem:[#allocation11 + $0x10] sm:$0xff]
        %v1225 = vld [vmem:[#allocation11 + $0x18] sm:$0xff]
        %v1226 = vld [vmem:[#allocation11 + $0x20] sm:$0xff]
        %v1227 = vld [vmem:[#allocation11 + $0x28] sm:$0xff]
        %v1228 = vld [vmem:[#allocation11 + $0x30] sm:$0xff]
        %v1229 = vld [vmem:[#allocation11 + $0x38] sm:$0xff]
        %v1230 = vmax.f32 %v1192, 0.0
        %v1231 = vmax.f32 %v1195, 0.0
        %v1232 = vmax.f32 %v1200, 0.0
        %v1233 = vmax.f32 %v1203, 0.0
        %v1234 = vmax.f32 %v1208, 0.0
        %v1235 = vmax.f32 %v1211, 0.0
        %v1236 = vmax.f32 %v1216, 0.0
        %v1237 = vmax.f32 %v1219, 0.0
        %v1238 = vmul.f32 %v1222, %v1230
        %v1239 = vmul.f32 %v1223, %v1231
        %v1240 = vmul.f32 %v1224, %v1232
        %v1241 = vmul.f32 %v1225, %v1233
        %v1242 = vmul.f32 %v1226, %v1234
        %v1243 = vmul.f32 %v1227, %v1235
        %v1244 = vmul.f32 %v1228, %v1236
        %v1245 = vmul.f32 %v1229, %v1237
        %v1246 = vld [vmem:[#allocation13] sm:$0xff]
        %v1247 = vld [vmem:[#allocation13 + $0x8] sm:$0xff]
        %v1248 = vld [vmem:[#allocation13 + $0x10] sm:$0x3]
        %v1249 = vld [vmem:[#allocation14] sm:$0x1]
        %v1251 = vlaneseq
        %v1252 = vshrl.u32 %v1251, 7
        %v1253 = vsub.s32 0, %v1252
        %v1254 = vrot.slane %v1249, %v1253
        %vm1256 = vcmask 146432
        %v1258 = vsel %vm1256, %v1238, 0
        %v1261 = vsel %vm1256, %v1239, 0
        %v1264 = vsel %vm1256, %v1240, 0
        %v1267 = vsel %vm1256, %v1241, 0
        %v1270 = vsel %vm1256, %v1242, 0
        %v1273 = vsel %vm1256, %v1243, 0
        %v1276 = vsel %vm1256, %v1244, 0
        %v1279 = vsel %vm1256, %v1245, 0
        %vm1281 = vcmask 1041408
        %v1283 = vsel %vm1281, %v1248, 0
        %1285 = vmatprep.subr.mxu0 0.0
        %1286 = vmatpush1.msra.mxu0 %v1246
        %1287 = vmatprep.subr.mxu0 0.0
        %1288 = vmatpush1.msra.mxu0 %v1247
        %1289 = vmatprep.subr.mxu0 0.0
        %1290 = vmatpush1.msra.mxu0 %v1283
        %1291 = vmatprep.subr.mxu0 0.0
        %1292 = vmatpush1.msra.mxu0 0.0
        %1293 = vmatprep.subr.mxu0 0.0
        %1294 = vmatpush1.msra.mxu0 0.0
        %1295 = vmatprep.subr.mxu0 0.0
        %1296 = vmatpush1.msra.mxu0 0.0
        %1297 = vmatprep.subr.mxu0 0.0
        %1298 = vmatpush1.msra.mxu0 0.0
        %1299 = vmatprep.subr.mxu0 0.0
        %1300 = vmatpush1.msra.mxu0 0.0
        %1301 = vmatprep.subr.mxu0 0.0
        %1302 = vmatpush1.msra.mxu0 0.0
        %1303 = vmatprep.subr.mxu0 0.0
        %1304 = vmatpush1.msra.mxu0 0.0
        %1305 = vmatprep.subr.mxu0 0.0
        %1306 = vmatpush1.msra.mxu0 0.0
        %1307 = vmatprep.subr.mxu0 0.0
        %1308 = vmatpush1.msra.mxu0 0.0
        %1309 = vmatprep.subr.mxu0 0.0
        %1310 = vmatpush1.msra.mxu0 0.0
        %1311 = vmatprep.subr.mxu0 0.0
        %1312 = vmatpush1.msra.mxu0 0.0
        %1313 = vmatprep.subr.mxu0 0.0
        %1314 = vmatpush1.msra.mxu0 0.0
        %1315 = vmatprep.subr.mxu0 0.0
        %1316 = vmatpush1.msra.mxu0 0.0
        %1317 = vmatprep.subr.mxu0 0.0
        %1318 = vmatpush1.msra.mxu0 0.0
        %1319 = vmatprep.subr.mxu0 0.0
        %1320 = vmatpush1.msra.mxu0 0.0
        %1321 = vmatprep.subr.mxu0 0.0
        %1322 = vmatpush1.msra.mxu0 0.0
        %1323 = vmatprep.subr.mxu0 0.0
        %1324 = vmatpush1.msra.mxu0 0.0
        %1325 = vmatprep.subr.mxu0 0.0
        %1326 = vmatpush1.msra.mxu0 0.0
        %1327 = vmatprep.subr.mxu0 0.0
        %1328 = vmatpush1.msra.mxu0 0.0
        %1329 = vmatprep.subr.mxu0 0.0
        %1330 = vmatpush1.msra.mxu0 0.0
        %1331 = vmatprep.subr.mxu0 0.0
        %1332 = vmatpush1.msra.mxu0 0.0
        %1333 = vmatprep.subr.mxu0 0.0
        %1334 = vmatpush1.msra.mxu0 0.0
        %1335 = vmatprep.subr.mxu0 0.0
        %1336 = vmatpush1.msra.mxu0 0.0
        %1337 = vmatprep.subr.mxu0 0.0
        %1338 = vmatpush1.msra.mxu0 0.0
        %1339 = vmatprep.subr.mxu0 0.0
        %1340 = vmatpush1.msra.mxu0 0.0
        %1341 = vmatprep.subr.mxu0 0.0
        %1342 = vmatpush1.msra.mxu0 0.0
        %1343 = vmatprep.subr.mxu0 0.0
        %1344 = vmatpush1.msra.mxu0 0.0
        %1345 = vmatprep.subr.mxu0 0.0
        %1346 = vmatpush1.msra.mxu0 0.0
        %1347 = vmatprep.subr.mxu0 0.0
        %1348 = vmatpush1.msra.mxu0 0.0
        %1349 = vmatprep.mubr.f32.mxu0 0.0
        %1350 = vmatmul.mubr.f32.gmra.mrb[0].mxu0 %v1258
        %v1351 = vpop.f32.mrb[0].mxu0
        %v1352 = vadd.f32 %v1254, %v1351
        %v1353 = vpop.f32.mrb[0].mxu0
        %1354 = vmatprep.mubr.f32.mxu0 0.0
        %1355 = vmatmul.mubr.f32.gmra.mrb[0].mxu0 %v1261
        %v1356 = vpop.f32.mrb[0].mxu0
        %v1357 = vadd.f32 %v1254, %v1356
        %v1358 = vpop.f32.mrb[0].mxu0
        %1359 = vmatprep.mubr.f32.mxu0 0.0
        %1360 = vmatmul.mubr.f32.gmra.mrb[0].mxu0 %v1264
        %v1361 = vpop.f32.mrb[0].mxu0
        %v1362 = vadd.f32 %v1254, %v1361
        %v1363 = vpop.f32.mrb[0].mxu0
        %1364 = vmatprep.mubr.f32.mxu0 0.0
        %1365 = vmatmul.mubr.f32.gmra.mrb[0].mxu0 %v1267
        %v1366 = vpop.f32.mrb[0].mxu0
        %v1367 = vadd.f32 %v1254, %v1366
        %v1368 = vpop.f32.mrb[0].mxu0
        %1369 = vmatprep.mubr.f32.mxu0 0.0
        %1370 = vmatmul.mubr.f32.gmra.mrb[0].mxu0 %v1270
        %v1371 = vpop.f32.mrb[0].mxu0
        %v1372 = vadd.f32 %v1254, %v1371
        %v1373 = vpop.f32.mrb[0].mxu0
        %1374 = vmatprep.mubr.f32.mxu0 0.0
        %1375 = vmatmul.mubr.f32.gmra.mrb[0].mxu0 %v1273
        %v1376 = vpop.f32.mrb[0].mxu0
        %v1377 = vadd.f32 %v1254, %v1376
        %v1378 = vpop.f32.mrb[0].mxu0
        %1379 = vmatprep.mubr.f32.mxu0 0.0
        %1380 = vmatmul.mubr.f32.gmra.mrb[0].mxu0 %v1276
        %v1381 = vpop.f32.mrb[0].mxu0
        %v1382 = vadd.f32 %v1254, %v1381
        %v1383 = vpop.f32.mrb[0].mxu0
        %1384 = vmatprep.mubr.f32.mxu0 0.0
        %1385 = vmatmul.mubr.f32.gmra.mrb[0].mxu0 %v1279
        %v1386 = vpop.f32.mrb[0].mxu0
        %v1387 = vadd.f32 %v1254, %v1386
        %v1388 = vpop.f32.mrb[0].mxu0
        %1389 = vdwg.mxu0
        %vm1390 = vcmask 72704
        %v1391 = vsel %vm1390, %v1352, -inf
        %1392 = vmax.xlane.f32.xlu0 %v1391
        %v1393 = vpop.xlane.xlu0 %1392
        %v1394 = vsel %vm1390, %v1357, -inf
        %1395 = vmax.xlane.f32.xlu0 %v1394
        %v1396 = vpop.xlane.xlu0 %1395
        %v1397 = vsel %vm1390, %v1362, -inf
        %1398 = vmax.xlane.f32.xlu0 %v1397
        %v1399 = vpop.xlane.xlu0 %1398
        %v1400 = vsel %vm1390, %v1367, -inf
        %1401 = vmax.xlane.f32.xlu0 %v1400
        %v1402 = vpop.xlane.xlu0 %1401
        %v1403 = vsel %vm1390, %v1372, -inf
        %1404 = vmax.xlane.f32.xlu0 %v1403
        %v1405 = vpop.xlane.xlu0 %1404
        %v1406 = vsel %vm1390, %v1377, -inf
        %1407 = vmax.xlane.f32.xlu0 %v1406
        %v1408 = vpop.xlane.xlu0 %1407
        %v1409 = vsel %vm1390, %v1382, -inf
        %1410 = vmax.xlane.f32.xlu0 %v1409
        %v1411 = vpop.xlane.xlu0 %1410
        %v1412 = vsel %vm1390, %v1387, -inf
        %1413 = vmax.xlane.f32.xlu0 %v1412
        %v1414 = vpop.xlane.xlu0 %1413
        %v1415 = vsub.f32 %v1352, %v1393
        %v1416 = vsub.f32 %v1357, %v1396
        %v1417 = vsub.f32 %v1362, %v1399
        %v1418 = vsub.f32 %v1367, %v1402
        %v1419 = vsub.f32 %v1372, %v1405
        %v1420 = vsub.f32 %v1377, %v1408
        %v1421 = vsub.f32 %v1382, %v1411
        %v1422 = vsub.f32 %v1387, %v1414
        %v1423 = vmul.f32 %v1415, 1.442695
        %v1424 = vpow.pop %v1423
        %v1425 = vmul.f32 %v1416, 1.442695
        %v1426 = vpow.pop %v1425
        %v1427 = vmul.f32 %v1417, 1.442695
        %v1428 = vpow.pop %v1427
        %v1429 = vmul.f32 %v1418, 1.442695
        %v1430 = vpow.pop %v1429
        %v1431 = vmul.f32 %v1419, 1.442695
        %v1432 = vpow.pop %v1431
        %v1433 = vmul.f32 %v1420, 1.442695
        %v1434 = vpow.pop %v1433
        %v1435 = vmul.f32 %v1421, 1.442695
        %v1436 = vpow.pop %v1435
        %v1437 = vmul.f32 %v1422, 1.442695
        %v1438 = vpow.pop %v1437
        %v1439 = vsel %vm1390, %v1424, 0.0
        %1440 = vadd.xlane.f32.xlu0 %v1439
        %v1441 = vpop.xlane.xlu0 %1440
        %v1442 = vsel %vm1390, %v1426, 0.0
        %1443 = vadd.xlane.f32.xlu0 %v1442
        %v1444 = vpop.xlane.xlu0 %1443
        %v1445 = vsel %vm1390, %v1428, 0.0
        %1446 = vadd.xlane.f32.xlu0 %v1445
        %v1447 = vpop.xlane.xlu0 %1446
        %v1448 = vsel %vm1390, %v1430, 0.0
        %1449 = vadd.xlane.f32.xlu0 %v1448
        %v1450 = vpop.xlane.xlu0 %1449
        %v1451 = vsel %vm1390, %v1432, 0.0
        %1452 = vadd.xlane.f32.xlu0 %v1451
        %v1453 = vpop.xlane.xlu0 %1452
        %v1454 = vsel %vm1390, %v1434, 0.0
        %1455 = vadd.xlane.f32.xlu0 %v1454
        %v1456 = vpop.xlane.xlu0 %1455
        %v1457 = vsel %vm1390, %v1436, 0.0
        %1458 = vadd.xlane.f32.xlu0 %v1457
        %v1459 = vpop.xlane.xlu0 %1458
        %v1460 = vsel %vm1390, %v1438, 0.0
        %1461 = vadd.xlane.f32.xlu0 %v1460
        %v1462 = vpop.xlane.xlu0 %1461
        %v1463 = vrcp.pop %v1441
        %v1464 = vrcp.pop %v1444
        %v1465 = vrcp.pop %v1447
        %v1466 = vrcp.pop %v1450
        %v1467 = vrcp.pop %v1453
        %v1468 = vrcp.pop %v1456
        %v1469 = vrcp.pop %v1459
        %v1470 = vrcp.pop %v1462
        %v1471 = vmul.f32 %v1424, %v1463
        %v1472 = vmul.f32 %v1426, %v1464
        %v1473 = vmul.f32 %v1428, %v1465
        %v1474 = vmul.f32 %v1430, %v1466
        %v1475 = vmul.f32 %v1432, %v1467
        %v1476 = vmul.f32 %v1434, %v1468
        %v1477 = vmul.f32 %v1436, %v1469
        %v1478 = vmul.f32 %v1438, %v1470
        %v1479 = vsel %vm1390, %v1471, 1.0
        %v1480 = vsel %vm1390, %v1472, 1.0
        %v1481 = vsel %vm1390, %v1473, 1.0
        %v1482 = vsel %vm1390, %v1474, 1.0
        %v1483 = vsel %vm1390, %v1475, 1.0
        %v1484 = vsel %vm1390, %v1476, 1.0
        %v1485 = vsel %vm1390, %v1477, 1.0
        %v1486 = vsel %vm1390, %v1478, 1.0
        %v1487 = vld [vmem:[#allocation16] sm:$0xff]
        %v1488 = vld [vmem:[#allocation16 + $0x8] sm:$0xff]
        %v1489 = vld [vmem:[#allocation16 + $0x10] sm:$0x3]
        %v1490 = vld [vmem:[#allocation16 + $0x18] sm:$0x3]
        %vm1491 = vcmask 80896
        %v1493 = vsel %vm1491, %v1479, 0
        %v1496 = vsel %vm1491, %v1480, 0
        %v1499 = vsel %vm1491, %v1481, 0
        %v1502 = vsel %vm1491, %v1482, 0
        %v1505 = vsel %vm1491, %v1483, 0
        %v1508 = vsel %vm1491, %v1484, 0
        %v1511 = vsel %vm1491, %v1485, 0
        %v1514 = vsel %vm1491, %v1486, 0
        %v1517 = vsel %vm1281, %v1489, 0
        %v1520 = vsel %vm1281, %v1490, 0
        %1522 = vmatprep.subr.mxu0 %v1488
        %1523 = vmatpush1.msra.mxu0 %v1487
        %1524 = vmatprep.subr.mxu0 %v1520
        %1525 = vmatpush1.msra.mxu0 %v1517
        %1526 = vmatprep.subr.mxu0 0.0
        %1527 = vmatpush1.msra.mxu0 0.0
        %1528 = vmatprep.subr.mxu0 0.0
        %1529 = vmatpush1.msra.mxu0 0.0
        %1530 = vmatprep.subr.mxu0 0.0
        %1531 = vmatpush1.msra.mxu0 0.0
        %1532 = vmatprep.subr.mxu0 0.0
        %1533 = vmatpush1.msra.mxu0 0.0
        %1534 = vmatprep.subr.mxu0 0.0
        %1535 = vmatpush1.msra.mxu0 0.0
        %1536 = vmatprep.subr.mxu0 0.0
        %1537 = vmatpush1.msra.mxu0 0.0
        %1538 = vmatprep.subr.mxu0 0.0
        %1539 = vmatpush1.msra.mxu0 0.0
        %1540 = vmatprep.subr.mxu0 0.0
        %1541 = vmatpush1.msra.mxu0 0.0
        %1542 = vmatprep.subr.mxu0 0.0
        %1543 = vmatpush1.msra.mxu0 0.0
        %1544 = vmatprep.subr.mxu0 0.0
        %1545 = vmatpush1.msra.mxu0 0.0
        %1546 = vmatprep.subr.mxu0 0.0
        %1547 = vmatpush1.msra.mxu0 0.0
        %1548 = vmatprep.subr.mxu0 0.0
        %1549 = vmatpush1.msra.mxu0 0.0
        %1550 = vmatprep.subr.mxu0 0.0
        %1551 = vmatpush1.msra.mxu0 0.0
        %1552 = vmatprep.subr.mxu0 0.0
        %1553 = vmatpush1.msra.mxu0 0.0
        %1554 = vmatprep.subr.mxu0 0.0
        %1555 = vmatpush1.msra.mxu0 0.0
        %1556 = vmatprep.subr.mxu0 0.0
        %1557 = vmatpush1.msra.mxu0 0.0
        %1558 = vmatprep.subr.mxu0 0.0
        %1559 = vmatpush1.msra.mxu0 0.0
        %1560 = vmatprep.subr.mxu0 0.0
        %1561 = vmatpush1.msra.mxu0 0.0
        %1562 = vmatprep.subr.mxu0 0.0
        %1563 = vmatpush1.msra.mxu0 0.0
        %1564 = vmatprep.subr.mxu0 0.0
        %1565 = vmatpush1.msra.mxu0 0.0
        %1566 = vmatprep.subr.mxu0 0.0
        %1567 = vmatpush1.msra.mxu0 0.0
        %1568 = vmatprep.subr.mxu0 0.0
        %1569 = vmatpush1.msra.mxu0 0.0
        %1570 = vmatprep.subr.mxu0 0.0
        %1571 = vmatpush1.msra.mxu0 0.0
        %1572 = vmatprep.subr.mxu0 0.0
        %1573 = vmatpush1.msra.mxu0 0.0
        %1574 = vmatprep.subr.mxu0 0.0
        %1575 = vmatpush1.msra.mxu0 0.0
        %1576 = vmatprep.subr.mxu0 0.0
        %1577 = vmatpush1.msra.mxu0 0.0
        %1578 = vmatprep.subr.mxu0 0.0
        %1579 = vmatpush1.msra.mxu0 0.0
        %1580 = vmatprep.subr.mxu0 0.0
        %1581 = vmatpush1.msra.mxu0 0.0
        %1582 = vmatprep.subr.mxu0 0.0
        %1583 = vmatpush1.msra.mxu0 0.0
        %1584 = vmatprep.subr.mxu0 0.0
        %1585 = vmatpush1.msra.mxu0 0.0
        %1586 = vmatprep.mubr.f32.mxu0 0.0
        %1587 = vmatmul.mubr.f32.gmra.mrb[0].mxu0 %v1493
        %v1588 = vpop.f32.mrb[0].mxu0
        %v1589 = vadd.f32 0.0, %v1588
        %v1590 = vpop.f32.mrb[0].mxu0
        %v1591 = vadd.f32 0.0, %v1590
        %1592 = vmatprep.mubr.f32.mxu0 0.0
        %1593 = vmatmul.mubr.f32.gmra.mrb[0].mxu0 %v1496
        %v1594 = vpop.f32.mrb[0].mxu0
        %v1595 = vadd.f32 0.0, %v1594
        %v1596 = vpop.f32.mrb[0].mxu0
        %v1597 = vadd.f32 0.0, %v1596
        %1598 = vmatprep.mubr.f32.mxu0 0.0
        %1599 = vmatmul.mubr.f32.gmra.mrb[0].mxu0 %v1499
        %v1600 = vpop.f32.mrb[0].mxu0
        %v1601 = vadd.f32 0.0, %v1600
        %v1602 = vpop.f32.mrb[0].mxu0
        %v1603 = vadd.f32 0.0, %v1602
        %1604 = vmatprep.mubr.f32.mxu0 0.0
        %1605 = vmatmul.mubr.f32.gmra.mrb[0].mxu0 %v1502
        %v1606 = vpop.f32.mrb[0].mxu0
        %v1607 = vadd.f32 0.0, %v1606
        %v1608 = vpop.f32.mrb[0].mxu0
        %v1609 = vadd.f32 0.0, %v1608
        %1610 = vmatprep.mubr.f32.mxu0 0.0
        %1611 = vmatmul.mubr.f32.gmra.mrb[0].mxu0 %v1505
        %v1612 = vpop.f32.mrb[0].mxu0
        %v1613 = vadd.f32 0.0, %v1612
        %v1614 = vpop.f32.mrb[0].mxu0
        %v1615 = vadd.f32 0.0, %v1614
        %1616 = vmatprep.mubr.f32.mxu0 0.0
        %1617 = vmatmul.mubr.f32.gmra.mrb[0].mxu0 %v1508
        %v1618 = vpop.f32.mrb[0].mxu0
        %v1619 = vadd.f32 0.0, %v1618
        %v1620 = vpop.f32.mrb[0].mxu0
        %v1621 = vadd.f32 0.0, %v1620
        %1622 = vmatprep.mubr.f32.mxu0 0.0
        %1623 = vmatmul.mubr.f32.gmra.mrb[0].mxu0 %v1511
        %v1624 = vpop.f32.mrb[0].mxu0
        %v1625 = vadd.f32 0.0, %v1624
        %v1626 = vpop.f32.mrb[0].mxu0
        %v1627 = vadd.f32 0.0, %v1626
        %1628 = vmatprep.mubr.f32.mxu0 0.0
        %1629 = vmatmul.mubr.f32.gmra.mrb[0].mxu0 %v1514
        %v1630 = vpop.f32.mrb[0].mxu0
        %v1631 = vadd.f32 0.0, %v1630
        %v1632 = vpop.f32.mrb[0].mxu0
        %v1633 = vadd.f32 0.0, %v1632
        %1634 = vdwg.mxu0
        %v1635 = vmul.f32 %v1040, %v1589
        %v1636 = vmul.f32 %v1042, %v1591
        %v1637 = vmul.f32 %v1044, %v1595
        %v1638 = vmul.f32 %v1046, %v1597
        %v1639 = vmul.f32 %v1050, %v1601
        %v1640 = vmul.f32 %v1052, %v1603
        %v1641 = vmul.f32 %v1054, %v1607
        %v1642 = vmul.f32 %v1056, %v1609
        %v1643 = vmul.f32 %v1060, %v1613
        %v1644 = vmul.f32 %v1062, %v1615
        %v1645 = vmul.f32 %v1064, %v1619
        %v1646 = vmul.f32 %v1066, %v1621
        %v1647 = vmul.f32 %v1070, %v1625
        %v1648 = vmul.f32 %v1072, %v1627
        %v1649 = vmul.f32 %v1074, %v1631
        %v1650 = vmul.f32 %v1076, %v1633
        %v1651 = vld [vmem:[#allocation17] sm:$0xff]
        %v1652 = vld [vmem:[#allocation17 + $0x8] sm:$0xff]
        %v1653 = vld [vmem:[#allocation17 + $0x10] sm:$0xff]
        %v1654 = vld [vmem:[#allocation17 + $0x18] sm:$0xff]
        %v1655 = vld [vmem:[#allocation17 + $0x20] sm:$0xff]
        %v1656 = vld [vmem:[#allocation17 + $0x28] sm:$0xff]
        %v1657 = vld [vmem:[#allocation17 + $0x30] sm:$0xff]
        %v1658 = vld [vmem:[#allocation17 + $0x38] sm:$0xff]
        %v1659 = vld [vmem:[#allocation17 + $0x40] sm:$0xff]
        %v1660 = vld [vmem:[#allocation17 + $0x48] sm:$0xff]
        %v1661 = vld [vmem:[#allocation17 + $0x50] sm:$0xff]
        %v1662 = vld [vmem:[#allocation17 + $0x58] sm:$0xff]
        %v1663 = vld [vmem:[#allocation17 + $0x60] sm:$0xff]
        %v1664 = vld [vmem:[#allocation17 + $0x68] sm:$0xff]
        %v1665 = vld [vmem:[#allocation17 + $0x70] sm:$0xff]
        %v1666 = vld [vmem:[#allocation17 + $0x78] sm:$0xff]
        %v1667 = vld [vmem:[#allocation17 + $0x80] sm:$0xff]
        %v1668 = vld [vmem:[#allocation17 + $0x88] sm:$0xff]
        %v1669 = vld [vmem:[#allocation17 + $0x90] sm:$0xff]
        %v1670 = vld [vmem:[#allocation17 + $0x98] sm:$0xff]
        %v1672 = vsel %vm811, %v1636, 0
        %v1675 = vsel %vm811, %v1638, 0
        %v1678 = vsel %vm811, %v1640, 0
        %v1681 = vsel %vm811, %v1642, 0
        %v1684 = vsel %vm811, %v1644, 0
        %v1687 = vsel %vm811, %v1646, 0
        %v1690 = vsel %vm811, %v1648, 0
        %v1693 = vsel %vm811, %v1650, 0
        %1695 = vmatprep.subr.mxu0 0.0
        %1696 = vmatpush1.msra.mxu0 %v1651
        %1697 = vmatprep.subr.mxu0 0.0
        %1698 = vmatpush1.msra.mxu0 %v1652
        %1699 = vmatprep.subr.mxu0 0.0
        %1700 = vmatpush1.msra.mxu0 %v1653
        %1701 = vmatprep.subr.mxu0 0.0
        %1702 = vmatpush1.msra.mxu0 %v1654
        %1703 = vmatprep.subr.mxu0 0.0
        %1704 = vmatpush1.msra.mxu0 %v1655
        %1705 = vmatprep.subr.mxu0 0.0
        %1706 = vmatpush1.msra.mxu0 %v1656
        %1707 = vmatprep.subr.mxu0 0.0
        %1708 = vmatpush1.msra.mxu0 %v1657
        %1709 = vmatprep.subr.mxu0 0.0
        %1710 = vmatpush1.msra.mxu0 %v1658
        %1711 = vmatprep.subr.mxu0 0.0
        %1712 = vmatpush1.msra.mxu0 %v1659
        %1713 = vmatprep.subr.mxu0 0.0
        %1714 = vmatpush1.msra.mxu0 %v1660
        %1715 = vmatprep.subr.mxu0 0.0
        %1716 = vmatpush1.msra.mxu0 %v1661
        %1717 = vmatprep.subr.mxu0 0.0
        %1718 = vmatpush1.msra.mxu0 %v1662
        %1719 = vmatprep.subr.mxu0 0.0
        %1720 = vmatpush1.msra.mxu0 %v1663
        %1721 = vmatprep.subr.mxu0 0.0
        %1722 = vmatpush1.msra.mxu0 %v1664
        %1723 = vmatprep.subr.mxu0 0.0
        %1724 = vmatpush1.msra.mxu0 %v1665
        %1725 = vmatprep.subr.mxu0 0.0
        %1726 = vmatpush1.msra.mxu0 %v1666
        %1727 = vmatprep.subr.mxu0 0.0
        %1728 = vmatpush1.msra.mxu0 %v1667
        %1729 = vmatprep.subr.mxu0 0.0
        %1730 = vmatpush1.msra.mxu0 %v1668
        %1731 = vmatprep.subr.mxu0 0.0
        %1732 = vmatpush1.msra.mxu0 %v1669
        %1733 = vmatprep.subr.mxu0 0.0
        %1734 = vmatpush1.msra.mxu0 %v1670
        %1735 = vmatprep.subr.mxu0 0.0
        %1736 = vmatpush1.msra.mxu0 0.0
        %1737 = vmatprep.subr.mxu0 0.0
        %1738 = vmatpush1.msra.mxu0 0.0
        %1739 = vmatprep.subr.mxu0 0.0
        %1740 = vmatpush1.msra.mxu0 0.0
        %1741 = vmatprep.subr.mxu0 0.0
        %1742 = vmatpush1.msra.mxu0 0.0
        %1743 = vmatprep.subr.mxu0 0.0
        %1744 = vmatpush1.msra.mxu0 0.0
        %1745 = vmatprep.subr.mxu0 0.0
        %1746 = vmatpush1.msra.mxu0 0.0
        %1747 = vmatprep.subr.mxu0 0.0
        %1748 = vmatpush1.msra.mxu0 0.0
        %1749 = vmatprep.subr.mxu0 0.0
        %1750 = vmatpush1.msra.mxu0 0.0
        %1751 = vmatprep.subr.mxu0 0.0
        %1752 = vmatpush1.msra.mxu0 0.0
        %1753 = vmatprep.subr.mxu0 0.0
        %1754 = vmatpush1.msra.mxu0 0.0
        %1755 = vmatprep.subr.mxu0 0.0
        %1756 = vmatpush1.msra.mxu0 0.0
        %1757 = vmatprep.subr.mxu0 0.0
        %1758 = vmatpush1.msra.mxu0 0.0
        %1759 = vmatprep.mubr.f32.mxu0 %v1672
        %1760 = vmatmul.mubr.f32.gmra.mrb[0].mxu0 %v1635
        %v1761 = vpop.f32.mrb[0].mxu0
        %v1762 = vadd.f32 0.0, %v1761
        %v1763 = vpop.f32.mrb[0].mxu0
        %1764 = vmatprep.mubr.f32.mxu0 %v1675
        %1765 = vmatmul.mubr.f32.gmra.mrb[0].mxu0 %v1637
        %v1766 = vpop.f32.mrb[0].mxu0
        %v1767 = vadd.f32 0.0, %v1766
        %v1768 = vpop.f32.mrb[0].mxu0
        %1769 = vmatprep.mubr.f32.mxu0 %v1678
        %1770 = vmatmul.mubr.f32.gmra.mrb[0].mxu0 %v1639
        %v1771 = vpop.f32.mrb[0].mxu0
        %v1772 = vadd.f32 0.0, %v1771
        %v1773 = vpop.f32.mrb[0].mxu0
        %1774 = vmatprep.mubr.f32.mxu0 %v1681
        %1775 = vmatmul.mubr.f32.gmra.mrb[0].mxu0 %v1641
        %v1776 = vpop.f32.mrb[0].mxu0
        %v1777 = vadd.f32 0.0, %v1776
        %v1778 = vpop.f32.mrb[0].mxu0
        %1779 = vmatprep.mubr.f32.mxu0 %v1684
        %1780 = vmatmul.mubr.f32.gmra.mrb[0].mxu0 %v1643
        %v1781 = vpop.f32.mrb[0].mxu0
        %v1782 = vadd.f32 0.0, %v1781
        %v1783 = vpop.f32.mrb[0].mxu0
        %1784 = vmatprep.mubr.f32.mxu0 %v1687
        %1785 = vmatmul.mubr.f32.gmra.mrb[0].mxu0 %v1645
        %v1786 = vpop.f32.mrb[0].mxu0
        %v1787 = vadd.f32 0.0, %v1786
        %v1788 = vpop.f32.mrb[0].mxu0
        %1789 = vmatprep.mubr.f32.mxu0 %v1690
        %1790 = vmatmul.mubr.f32.gmra.mrb[0].mxu0 %v1647
        %v1791 = vpop.f32.mrb[0].mxu0
        %v1792 = vadd.f32 0.0, %v1791
        %v1793 = vpop.f32.mrb[0].mxu0
        %1794 = vmatprep.mubr.f32.mxu0 %v1693
        %1795 = vmatmul.mubr.f32.gmra.mrb[0].mxu0 %v1649
        %v1796 = vpop.f32.mrb[0].mxu0
        %v1797 = vadd.f32 0.0, %v1796
        %v1798 = vpop.f32.mrb[0].mxu0
        %1799 = vdwg.mxu0
        %1800 = vst.msk [vmem:[%s502] sm:$0xff] %vm802, %v1762
        %1801 = vst.msk [vmem:[%s502 + $0x8] sm:$0xff] %vm802, %v1767
        %1802 = vst.msk [vmem:[%s502 + $0x10] sm:$0xff] %vm802, %v1772
        %1803 = vst.msk [vmem:[%s502 + $0x18] sm:$0xff] %vm802, %v1777
        %1804 = vst.msk [vmem:[%s502 + $0x20] sm:$0xff] %vm802, %v1782
        %1805 = vst.msk [vmem:[%s502 + $0x28] sm:$0xff] %vm802, %v1787
        %1806 = vst.msk [vmem:[%s502 + $0x30] sm:$0xff] %vm802, %v1792
        %1807 = vst.msk [vmem:[%s502 + $0x38] sm:$0xff] %vm802, %v1797
        %s1808 = sand.u32 %s255, 1
        %s1809 = scalar_lea.sflag [#allocation4], %s1808
        %s1810 = sand.u32 %s255, 1
        %s1811 = smul.addr %s1810, 64
        %s1812 = scalar_lea.vmem [#allocation19], %s1811
        // Predicated region
        $region101: #{tpu_custom_call.1} parent=59 // pred_check
          %p1813 = pneg %p265
        $region102: #{tpu_custom_call.1} parent=59 // pred_check_branch
          %1815 = sbr.rel (%p1813) target = $region104
        $region103: #{tpu_custom_call.1} parent=59 // pred_region
          %s1817 = ssub.s32 1024, 1024
          %1818 = vsyncadd %s1809, %s1817
          %s1819 = smul.addr %s32, 8
          %s1820 = smul.addr %s1819, 128
          %s1821 = scalar_lea.hbm %s10, %s1820
          %s1822 = sshll.u32 %s1812, 4
          %s1823 = int_to_ptr.vmem [resolvable:$true] %s1822
          %1828 = dma.vmem_to_hbm [thread:$0]  %s1823, 1024, %s1821, %s1809, 128, 128, 8
        $region104: #{tpu_custom_call.1} parent=59 // pred_fallthru
          _
      $region60: #{tpu_custom_call.1} parent=5 // pred_fallthru
        _
      %p1829 = scmp.le.s32.totalorder 2, %s27
      // Predicated region
      $region105: #{tpu_custom_call.1} parent=5 // pred_check
        %p1830 = pneg %p1829
      $region106: #{tpu_custom_call.1} parent=5 // pred_check_branch
        %1832 = sbr.rel (%p1830) target = $region108
      $region107: #{tpu_custom_call.1} parent=5 // pred_region
        %s1833 = ssub.s32 %s27, 2
        // Predicated region
        $region109: #{tpu_custom_call.1} parent=107 // pred_check
          %p1834 = pneg %p271
        $region110: #{tpu_custom_call.1} parent=107 // pred_check_branch
          %1836 = sbr.rel (%p1834) target = $region112
        $region111: #{tpu_custom_call.1} parent=107 // pred_region
          %s1837 = sand.u32 %s256, 1
          %s1838 = scalar_lea.sflag [#allocation4], %s1837
          %s1839 = sand.u32 %s256, 1
          %s1840 = smul.addr %s1839, 64
          %s1841 = scalar_lea.vmem [#allocation19], %s1840
          %1842 = dma.done %s1838, 1024
        $region112: #{tpu_custom_call.1} parent=107 // pred_fallthru
          _
      $region108: #{tpu_custom_call.1} parent=5 // pred_fallthru
        _
    $region6: #{tpu_custom_call.1} parent=1 // loop_footer
      %s31 = sadd.s32 1, %s27
    $region7: #{tpu_custom_call.1} parent=1 // loop_footer_branch
      %26 = sbr.rel target = $region3
    $region8: #{tpu_custom_call.1} parent=1 // loop_exit
      _
    %1843 = vsyncpa [#allocation3], 1
    %s1844 = scalar_lea.sflag [#allocation3], 1
    %1845 = vsyncpa %s1844, 1
    %1846 = vsyncpa [#allocation6], 1
    %1847 = vsyncpa [#allocation9], 1
    %1848 = vsyncpa [#allocation12], 1
    %1849 = vsyncpa [#allocation15], 1
    %1850 = vsyncpa [#allocation18], 1
    %1851 = vsyncpa [#allocation4], 1
    %s1852 = scalar_lea.sflag [#allocation4], 1
    %1853 = vsyncpa %s1852, 1

</llo_original>
